<compile_context>
chip_gen: v6e
topology: v6e:2x2x1
jax: 0.10.0
libtpu: 0.0.40
codegen_flags: <defaults>
</compile_context>

<pallas_src>
import functools

import jax
import jax.numpy as jnp
import numpy as np
from jax import lax
from jax.experimental import pallas as pl
from jax.experimental.pallas import tpu as pltpu  # noqa: F401  (no scratch/grid needed at these shapes)


def _text_gen_kernel(
    x_ref,      # (T*B, V)  bulk dtype (bf16 default)
    wih0_ref,   # (V, 4H)   bulk dtype
    b0_ref,     # (1, 4H)   f32
    whh0_ref,   # (H, 4H)   f32  (recurrent, stays f32)
    wih1_ref,   # (H, 4H)   f32  (on the layer0->layer1 chain, stays f32)
    whh1_ref,   # (H, 4H)   f32
    b1_ref,     # (1, 4H)   f32
    wlin_ref,   # (H, V)    bulk dtype
    blin_ref,   # (1, V)    f32
    out_ref,    # (T*B, V)  f32
    *, seq_len, batch, hidden,
):
    f32 = jnp.float32
    H = hidden

    # ---------------- hoisted off the recurrent critical path ----------------
    # Input projection for ALL timesteps in ONE matmul, bias b0 folded in.
    pre0 = (
        jnp.dot(x_ref[...], wih0_ref[...], preferred_element_type=f32)
        + b0_ref[...]
    )  # (T*B, 4H) f32

    # Hoisted broadcasts / constants (JAX does not CSE broadcast_in_dim).
    b1 = jnp.broadcast_to(b1_ref[...], (batch, 4 * H))
    lane = lax.broadcasted_iota(jnp.int32, (batch, 4 * H), 1)
    is_g = jnp.logical_and(lane >= 2 * H, lane < 3 * H)      # PyTorch order i,f,g,o
    gate_scale = jnp.where(is_g, 1.0, 0.5).astype(f32)       # tanh lanes vs sigmoid lanes
    gate_shift = jnp.where(is_g, 0.0, 0.5).astype(f32)

    def lstm_update(z, c):
        # One EUP tanh pass activates all four gates:
        #   sigmoid(x) = 0.5*tanh(0.5*x) + 0.5   (i, f, o lanes)
        #   tanh(x)                              (g lanes)
        t = jnp.tanh(z * gate_scale)
        act = gate_scale * t + gate_shift
        i = act[:, 0 * H:1 * H]
        f = act[:, 1 * H:2 * H]
        g = act[:, 2 * H:3 * H]
        o = act[:, 3 * H:4 * H]
        c_new = f * c + i * g
        h_new = o * jnp.tanh(c_new)
        return h_new, c_new

    # Recurrent state lives in loop-carried vregs; no staging scratch buffers.
    h0 = jnp.zeros((batch, H), f32)
    c0 = jnp.zeros((batch, H), f32)
    h1 = jnp.zeros((batch, H), f32)
    c1 = jnp.zeros((batch, H), f32)
    h1_steps = []

    # Fully unrolled recurrence: only the small K=H dots stay on the chain.
    for t in range(seq_len):
        # ---- layer 0: recurrent K=H dot only; input projection comes from pre0 ----
        z0 = pre0[t * batch:(t + 1) * batch, :] + jnp.dot(
            h0, whh0_ref[...], preferred_element_type=f32)
        h0, c0 = lstm_update(z0, c0)

        # ---- layer 1: two compact K=H dots straight from loop-carried vregs ----
        z1 = (
            jnp.dot(h0, wih1_ref[...], preferred_element_type=f32)
            + jnp.dot(h1, whh1_ref[...], preferred_element_type=f32)
            + b1
        )
        h1, c1 = lstm_update(z1, c1)
        h1_steps.append(h1)

    # -------- head, off the chain: ONE matmul over all T*B rows, one slab store ----
    h1_all = jnp.concatenate(h1_steps, axis=0).astype(wlin_ref.dtype)   # (T*B, H)
    logits = (
        jnp.dot(h1_all, wlin_ref[...], preferred_element_type=f32)
        + blin_ref[...]
    )  # (T*B, V) f32
    out_ref[...] = logits   # single full-width, lane-dense, unmasked store


@functools.partial(jax.jit, static_argnames=("bulk_dtype",))
def text_generation_forward(x, params, bulk_dtype=jnp.bfloat16):
    """x: (T, B, V) float32 -> logits (T, B, V) float32."""
    T, B, V = x.shape
    H = params["whh0"].shape[0]

    # Host-side prep: only the two bulk, non-recurrent matmul operands
    # (input projection and head) are cast to bf16 (f32 accumulation in the
    # kernel); the tiny recurrent dots stay f32.
    x_flat = x.reshape(T * B, V).astype(bulk_dtype)
    wih0 = params["wih0"].astype(bulk_dtype)
    wlin = params["wlin"].astype(bulk_dtype)

    kernel = functools.partial(_text_gen_kernel, seq_len=T, batch=B, hidden=H)

    logits = pl.pallas_call(
        kernel,
        out_shape=jax.ShapeDtypeStruct((T * B, V), jnp.float32),
        # No grid: all inputs/outputs/weights (< ~0.3 MB) are whole-array
        # VMEM-resident via the default BlockSpecs; the recurrence runs fully
        # unrolled inside one invocation (no per-step grid/pipeline overhead).
        # TODO(synk): at production vocab sizes (esp. v7x 64 MiB VMEM) the head
        # and the hoisted input projection need a vocab grid axis (>=512-lane
        # tiles) instead of whole-array residency.
    )(
        x_flat, wih0, params["b0"], params["whh0"], params["wih1"],
        params["whh1"], params["b1"], wlin, params["blin"],
    )
    # Free metadata reshape back to time-major (T, B, V).
    return logits.reshape(T, B, V)


# ----------------------- pure-JAX reference (for checking) -----------------------
def _reference_forward(x, params):
    T, B, V = x.shape
    H = params["whh0"].shape[0]

    def cell(x_t, h, c, wih, whh, b):
        gates = x_t @ wih + h @ whh + b
        i = jax.nn.sigmoid(gates[:, 0 * H:1 * H])
        f = jax.nn.sigmoid(gates[:, 1 * H:2 * H])
        g = jnp.tanh(gates[:, 2 * H:3 * H])
        o = jax.nn.sigmoid(gates[:, 3 * H:4 * H])
        c_new = f * c + i * g
        h_new = o * jnp.tanh(c_new)
        return h_new, c_new

    def scan_fn(carry, x_t):
        h0, c0, h1, c1 = carry
        h0, c0 = cell(x_t, h0, c0, params["wih0"], params["whh0"], params["b0"])
        h1, c1 = cell(h0, h1, c1, params["wih1"], params["whh1"], params["b1"])
        y = h1 @ params["wlin"] + params["blin"]
        return (h0, c0, h1, c1), y

    z = jnp.zeros((B, H), jnp.float32)
    _, ys = jax.lax.scan(scan_fn, (z, z, z, z), x)
    return ys


# ---------------------------------- driver ----------------------------------
if __name__ == "__main__":
    # Small shapes consistent with the module's forward():
    #   seq_length=8, batch_size=8, vocabulary_size=128, lstm_num_hidden=32
    T, B, V, H = 8, 8, 128, 32

    key = jax.random.PRNGKey(0)
    ks = jax.random.split(key, 10)
    bound = 1.0 / np.sqrt(H)  # PyTorch default uniform(-1/sqrt(H), 1/sqrt(H))
    u = lambda k, shape: jax.random.uniform(
        k, shape, jnp.float32, minval=-bound, maxval=bound
    )

    # Weights stored pre-transposed (input_dim, 4H) so the kernel does x @ W.
    # Combined biases b = b_ih + b_hh, kept as two uniform draws summed.
    params = {
        "wih0": u(ks[0], (V, 4 * H)),
        "whh0": u(ks[1], (H, 4 * H)),
        "b0": (u(ks[2], (1, 4 * H)) + u(ks[3], (1, 4 * H))),
        "wih1": u(ks[4], (H, 4 * H)),
        "whh1": u(ks[5], (H, 4 * H)),
        "b1": (u(ks[6], (1, 4 * H)) + u(ks[7], (1, 4 * H))),
        "wlin": u(ks[8], (H, V)),
        "blin": u(ks[9], (1, V)),
    }

    x = jax.random.normal(jax.random.PRNGKey(1), (T, B, V), jnp.float32)

    ref = jax.block_until_ready(_reference_forward(x, params))

    # 1) Structural/exactness check: all-f32 bulk matmuls must match the pure-f32
    #    reference tightly (covers gate order, biases, recurrence, head).
    out_f32 = jax.block_until_ready(
        text_generation_forward(x, params, bulk_dtype=jnp.float32))
    assert out_f32.shape == (T, B, V)
    np.testing.assert_allclose(
        np.asarray(out_f32), np.asarray(ref), atol=1e-4, rtol=1e-4)

    # 2) Default performance configuration: bf16 operands (f32 accumulate) on the
    #    two bulk, non-recurrent matmuls only. Expected max logit deviation from
    #    the f32 reference is ~1e-2; the loose tolerance here only guards the
    #    precision config — structure is verified by the f32 check above.
    out = jax.block_until_ready(text_generation_forward(x, params))
    assert out.shape == (T, B, V)
    np.testing.assert_allclose(np.asarray(out), np.asarray(ref), atol=5e-2, rtol=2e-2)

    print("KERNEL_OK")
</pallas_src>

<mosaic_0001>
module attributes {stable_mosaic.version = 11 : i64} {
  func.func @_text_gen_kernel(%arg0: memref<64x128xf32, #tpu.memory_space<vmem>>, %arg1: memref<128x128xf32, #tpu.memory_space<vmem>>, %arg2: memref<1x128xf32, #tpu.memory_space<vmem>>, %arg3: memref<32x128xf32, #tpu.memory_space<vmem>>, %arg4: memref<32x128xf32, #tpu.memory_space<vmem>>, %arg5: memref<32x128xf32, #tpu.memory_space<vmem>>, %arg6: memref<1x128xf32, #tpu.memory_space<vmem>>, %arg7: memref<32x128xf32, #tpu.memory_space<vmem>>, %arg8: memref<1x128xf32, #tpu.memory_space<vmem>>, %arg9: memref<64x128xf32, #tpu.memory_space<vmem>>) attributes {dimension_semantics = [], scalar_prefetch = 0 : i64, scratch_operands = 0 : i64, tpu.core_type = #tpu.core_type<tc>} {
    %c0 = arith.constant 0 : index
    %c0_0 = arith.constant 0 : index
    %0 = vector.load %arg0[%c0, %c0_0] : memref<64x128xf32, #tpu.memory_space<vmem>>, vector<64x128xf32>
    %c0_1 = arith.constant 0 : index
    %c0_2 = arith.constant 0 : index
    %1 = vector.load %arg1[%c0_1, %c0_2] : memref<128x128xf32, #tpu.memory_space<vmem>>, vector<128x128xf32>
    %cst = arith.constant dense<0.000000e+00> : vector<64x128xf32>
    %2 = tpu.matmul %0, %1, %cst {dimension_numbers = #tpu.dot_dimension_numbers<[1], [0], [0], [1], [0, 0, 1, 1], [], []>} : vector<64x128xf32>, vector<128x128xf32>, vector<64x128xf32> -> vector<64x128xf32>
    %c0_3 = arith.constant 0 : index
    %c0_4 = arith.constant 0 : index
    %3 = vector.load %arg2[%c0_3, %c0_4] : memref<1x128xf32, #tpu.memory_space<vmem>>, vector<1x128xf32>
    %4 = vector.broadcast %3 : vector<1x128xf32> to vector<64x128xf32>
    %5 = arith.addf %2, %4 : vector<64x128xf32>
    %c0_5 = arith.constant 0 : index
    %c0_6 = arith.constant 0 : index
    %6 = vector.load %arg6[%c0_5, %c0_6] : memref<1x128xf32, #tpu.memory_space<vmem>>, vector<1x128xf32>
    %7 = vector.shape_cast %6 : vector<1x128xf32> to vector<1x128xf32>
    %8 = vector.broadcast %7 : vector<1x128xf32> to vector<8x128xf32>
    %9 = tpu.iota {dimensions = array<i32: 1>} : vector<8x128xi32>
    %c64_i32 = arith.constant 64 : i32
    %10 = vector.broadcast %c64_i32 : i32 to vector<8x128xi32>
    %11 = arith.cmpi sge, %9, %10 : vector<8x128xi32>
    %c96_i32 = arith.constant 96 : i32
    %12 = vector.broadcast %c96_i32 : i32 to vector<8x128xi32>
    %13 = arith.cmpi slt, %9, %12 : vector<8x128xi32>
    %14 = arith.andi %11, %13 : vector<8x128xi1>
    %cst_7 = arith.constant 1.000000e+00 : f32
    %cst_8 = arith.constant 5.000000e-01 : f32
    %15 = vector.broadcast %cst_7 : f32 to vector<8x128xf32>
    %16 = vector.broadcast %cst_8 : f32 to vector<8x128xf32>
    %17 = arith.select %14, %15, %16 : vector<8x128xi1>, vector<8x128xf32>
    %cst_9 = arith.constant 0.000000e+00 : f32
    %cst_10 = arith.constant 5.000000e-01 : f32
    %18 = vector.broadcast %cst_9 : f32 to vector<8x128xf32>
    %19 = vector.broadcast %cst_10 : f32 to vector<8x128xf32>
    %20 = arith.select %14, %18, %19 : vector<8x128xi1>, vector<8x128xf32>
    %cst_11 = arith.constant 0.000000e+00 : f32
    %21 = vector.broadcast %cst_11 : f32 to vector<8x32xf32>
    %cst_12 = arith.constant 0.000000e+00 : f32
    %22 = vector.broadcast %cst_12 : f32 to vector<8x32xf32>
    %cst_13 = arith.constant 0.000000e+00 : f32
    %23 = vector.broadcast %cst_13 : f32 to vector<8x32xf32>
    %cst_14 = arith.constant 0.000000e+00 : f32
    %24 = vector.broadcast %cst_14 : f32 to vector<8x32xf32>
    %25 = vector.extract_strided_slice %5 {offsets = [0, 0], sizes = [8, 128], strides = [1, 1]} : vector<64x128xf32> to vector<8x128xf32>
    %c0_15 = arith.constant 0 : index
    %c0_16 = arith.constant 0 : index
    %26 = vector.load %arg3[%c0_15, %c0_16] : memref<32x128xf32, #tpu.memory_space<vmem>>, vector<32x128xf32>
    %cst_17 = arith.constant dense<0.000000e+00> : vector<8x128xf32>
    %27 = tpu.matmul %21, %26, %cst_17 {dimension_numbers = #tpu.dot_dimension_numbers<[1], [0], [0], [1], [0, 0, 1, 1], [], []>} : vector<8x32xf32>, vector<32x128xf32>, vector<8x128xf32> -> vector<8x128xf32>
    %28 = arith.addf %25, %27 : vector<8x128xf32>
    %29 = arith.mulf %28, %17 : vector<8x128xf32>
    %30 = math.tanh %29 : vector<8x128xf32>
    %31 = arith.mulf %17, %30 : vector<8x128xf32>
    %32 = arith.addf %31, %20 : vector<8x128xf32>
    %33 = vector.extract_strided_slice %32 {offsets = [0, 0], sizes = [8, 32], strides = [1, 1]} : vector<8x128xf32> to vector<8x32xf32>
    %34 = vector.extract_strided_slice %32 {offsets = [0, 32], sizes = [8, 32], strides = [1, 1]} : vector<8x128xf32> to vector<8x32xf32>
    %35 = vector.extract_strided_slice %32 {offsets = [0, 64], sizes = [8, 32], strides = [1, 1]} : vector<8x128xf32> to vector<8x32xf32>
    %36 = vector.extract_strided_slice %32 {offsets = [0, 96], sizes = [8, 32], strides = [1, 1]} : vector<8x128xf32> to vector<8x32xf32>
    %37 = arith.mulf %34, %22 : vector<8x32xf32>
    %38 = arith.mulf %33, %35 : vector<8x32xf32>
    %39 = arith.addf %37, %38 : vector<8x32xf32>
    %40 = math.tanh %39 : vector<8x32xf32>
    %41 = arith.mulf %36, %40 : vector<8x32xf32>
    %c0_18 = arith.constant 0 : index
    %c0_19 = arith.constant 0 : index
    %42 = vector.load %arg4[%c0_18, %c0_19] : memref<32x128xf32, #tpu.memory_space<vmem>>, vector<32x128xf32>
    %cst_20 = arith.constant dense<0.000000e+00> : vector<8x128xf32>
    %43 = tpu.matmul %41, %42, %cst_20 {dimension_numbers = #tpu.dot_dimension_numbers<[1], [0], [0], [1], [0, 0, 1, 1], [], []>} : vector<8x32xf32>, vector<32x128xf32>, vector<8x128xf32> -> vector<8x128xf32>
    %c0_21 = arith.constant 0 : index
    %c0_22 = arith.constant 0 : index
    %44 = vector.load %arg5[%c0_21, %c0_22] : memref<32x128xf32, #tpu.memory_space<vmem>>, vector<32x128xf32>
    %cst_23 = arith.constant dense<0.000000e+00> : vector<8x128xf32>
    %45 = tpu.matmul %23, %44, %cst_23 {dimension_numbers = #tpu.dot_dimension_numbers<[1], [0], [0], [1], [0, 0, 1, 1], [], []>} : vector<8x32xf32>, vector<32x128xf32>, vector<8x128xf32> -> vector<8x128xf32>
    %46 = arith.addf %43, %45 : vector<8x128xf32>
    %47 = arith.addf %46, %8 : vector<8x128xf32>
    %48 = arith.mulf %47, %17 : vector<8x128xf32>
    %49 = math.tanh %48 : vector<8x128xf32>
    %50 = arith.mulf %17, %49 : vector<8x128xf32>
    %51 = arith.addf %50, %20 : vector<8x128xf32>
    %52 = vector.extract_strided_slice %51 {offsets = [0, 0], sizes = [8, 32], strides = [1, 1]} : vector<8x128xf32> to vector<8x32xf32>
    %53 = vector.extract_strided_slice %51 {offsets = [0, 32], sizes = [8, 32], strides = [1, 1]} : vector<8x128xf32> to vector<8x32xf32>
    %54 = vector.extract_strided_slice %51 {offsets = [0, 64], sizes = [8, 32], strides = [1, 1]} : vector<8x128xf32> to vector<8x32xf32>
    %55 = vector.extract_strided_slice %51 {offsets = [0, 96], sizes = [8, 32], strides = [1, 1]} : vector<8x128xf32> to vector<8x32xf32>
    %56 = arith.mulf %53, %24 : vector<8x32xf32>
    %57 = arith.mulf %52, %54 : vector<8x32xf32>
    %58 = arith.addf %56, %57 : vector<8x32xf32>
    %59 = math.tanh %58 : vector<8x32xf32>
    %60 = arith.mulf %55, %59 : vector<8x32xf32>
    %61 = vector.extract_strided_slice %5 {offsets = [8, 0], sizes = [8, 128], strides = [1, 1]} : vector<64x128xf32> to vector<8x128xf32>
    %c0_24 = arith.constant 0 : index
    %c0_25 = arith.constant 0 : index
    %62 = vector.load %arg3[%c0_24, %c0_25] : memref<32x128xf32, #tpu.memory_space<vmem>>, vector<32x128xf32>
    %cst_26 = arith.constant dense<0.000000e+00> : vector<8x128xf32>
    %63 = tpu.matmul %41, %62, %cst_26 {dimension_numbers = #tpu.dot_dimension_numbers<[1], [0], [0], [1], [0, 0, 1, 1], [], []>} : vector<8x32xf32>, vector<32x128xf32>, vector<8x128xf32> -> vector<8x128xf32>
    %64 = arith.addf %61, %63 : vector<8x128xf32>
    %65 = arith.mulf %64, %17 : vector<8x128xf32>
    %66 = math.tanh %65 : vector<8x128xf32>
    %67 = arith.mulf %17, %66 : vector<8x128xf32>
    %68 = arith.addf %67, %20 : vector<8x128xf32>
    %69 = vector.extract_strided_slice %68 {offsets = [0, 0], sizes = [8, 32], strides = [1, 1]} : vector<8x128xf32> to vector<8x32xf32>
    %70 = vector.extract_strided_slice %68 {offsets = [0, 32], sizes = [8, 32], strides = [1, 1]} : vector<8x128xf32> to vector<8x32xf32>
    %71 = vector.extract_strided_slice %68 {offsets = [0, 64], sizes = [8, 32], strides = [1, 1]} : vector<8x128xf32> to vector<8x32xf32>
    %72 = vector.extract_strided_slice %68 {offsets = [0, 96], sizes = [8, 32], strides = [1, 1]} : vector<8x128xf32> to vector<8x32xf32>
    %73 = arith.mulf %70, %39 : vector<8x32xf32>
    %74 = arith.mulf %69, %71 : vector<8x32xf32>
    %75 = arith.addf %73, %74 : vector<8x32xf32>
    %76 = math.tanh %75 : vector<8x32xf32>
    %77 = arith.mulf %72, %76 : vector<8x32xf32>
    %c0_27 = arith.constant 0 : index
    %c0_28 = arith.constant 0 : index
    %78 = vector.load %arg4[%c0_27, %c0_28] : memref<32x128xf32, #tpu.memory_space<vmem>>, vector<32x128xf32>
    %cst_29 = arith.constant dense<0.000000e+00> : vector<8x128xf32>
    %79 = tpu.matmul %77, %78, %cst_29 {dimension_numbers = #tpu.dot_dimension_numbers<[1], [0], [0], [1], [0, 0, 1, 1], [], []>} : vector<8x32xf32>, vector<32x128xf32>, vector<8x128xf32> -> vector<8x128xf32>
    %c0_30 = arith.constant 0 : index
    %c0_31 = arith.constant 0 : index
    %80 = vector.load %arg5[%c0_30, %c0_31] : memref<32x128xf32, #tpu.memory_space<vmem>>, vector<32x128xf32>
    %cst_32 = arith.constant dense<0.000000e+00> : vector<8x128xf32>
    %81 = tpu.matmul %60, %80, %cst_32 {dimension_numbers = #tpu.dot_dimension_numbers<[1], [0], [0], [1], [0, 0, 1, 1], [], []>} : vector<8x32xf32>, vector<32x128xf32>, vector<8x128xf32> -> vector<8x128xf32>
    %82 = arith.addf %79, %81 : vector<8x128xf32>
    %83 = arith.addf %82, %8 : vector<8x128xf32>
    %84 = arith.mulf %83, %17 : vector<8x128xf32>
    %85 = math.tanh %84 : vector<8x128xf32>
    %86 = arith.mulf %17, %85 : vector<8x128xf32>
    %87 = arith.addf %86, %20 : vector<8x128xf32>
    %88 = vector.extract_strided_slice %87 {offsets = [0, 0], sizes = [8, 32], strides = [1, 1]} : vector<8x128xf32> to vector<8x32xf32>
    %89 = vector.extract_strided_slice %87 {offsets = [0, 32], sizes = [8, 32], strides = [1, 1]} : vector<8x128xf32> to vector<8x32xf32>
    %90 = vector.extract_strided_slice %87 {offsets = [0, 64], sizes = [8, 32], strides = [1, 1]} : vector<8x128xf32> to vector<8x32xf32>
    %91 = vector.extract_strided_slice %87 {offsets = [0, 96], sizes = [8, 32], strides = [1, 1]} : vector<8x128xf32> to vector<8x32xf32>
    %92 = arith.mulf %89, %58 : vector<8x32xf32>
    %93 = arith.mulf %88, %90 : vector<8x32xf32>
    %94 = arith.addf %92, %93 : vector<8x32xf32>
    %95 = math.tanh %94 : vector<8x32xf32>
    %96 = arith.mulf %91, %95 : vector<8x32xf32>
    %97 = vector.extract_strided_slice %5 {offsets = [16, 0], sizes = [8, 128], strides = [1, 1]} : vector<64x128xf32> to vector<8x128xf32>
    %c0_33 = arith.constant 0 : index
    %c0_34 = arith.constant 0 : index
    %98 = vector.load %arg3[%c0_33, %c0_34] : memref<32x128xf32, #tpu.memory_space<vmem>>, vector<32x128xf32>
    %cst_35 = arith.constant dense<0.000000e+00> : vector<8x128xf32>
    %99 = tpu.matmul %77, %98, %cst_35 {dimension_numbers = #tpu.dot_dimension_numbers<[1], [0], [0], [1], [0, 0, 1, 1], [], []>} : vector<8x32xf32>, vector<32x128xf32>, vector<8x128xf32> -> vector<8x128xf32>
    %100 = arith.addf %97, %99 : vector<8x128xf32>
    %101 = arith.mulf %100, %17 : vector<8x128xf32>
    %102 = math.tanh %101 : vector<8x128xf32>
    %103 = arith.mulf %17, %102 : vector<8x128xf32>
    %104 = arith.addf %103, %20 : vector<8x128xf32>
    %105 = vector.extract_strided_slice %104 {offsets = [0, 0], sizes = [8, 32], strides = [1, 1]} : vector<8x128xf32> to vector<8x32xf32>
    %106 = vector.extract_strided_slice %104 {offsets = [0, 32], sizes = [8, 32], strides = [1, 1]} : vector<8x128xf32> to vector<8x32xf32>
    %107 = vector.extract_strided_slice %104 {offsets = [0, 64], sizes = [8, 32], strides = [1, 1]} : vector<8x128xf32> to vector<8x32xf32>
    %108 = vector.extract_strided_slice %104 {offsets = [0, 96], sizes = [8, 32], strides = [1, 1]} : vector<8x128xf32> to vector<8x32xf32>
    %109 = arith.mulf %106, %75 : vector<8x32xf32>
    %110 = arith.mulf %105, %107 : vector<8x32xf32>
    %111 = arith.addf %109, %110 : vector<8x32xf32>
    %112 = math.tanh %111 : vector<8x32xf32>
    %113 = arith.mulf %108, %112 : vector<8x32xf32>
    %c0_36 = arith.constant 0 : index
    %c0_37 = arith.constant 0 : index
    %114 = vector.load %arg4[%c0_36, %c0_37] : memref<32x128xf32, #tpu.memory_space<vmem>>, vector<32x128xf32>
    %cst_38 = arith.constant dense<0.000000e+00> : vector<8x128xf32>
    %115 = tpu.matmul %113, %114, %cst_38 {dimension_numbers = #tpu.dot_dimension_numbers<[1], [0], [0], [1], [0, 0, 1, 1], [], []>} : vector<8x32xf32>, vector<32x128xf32>, vector<8x128xf32> -> vector<8x128xf32>
    %c0_39 = arith.constant 0 : index
    %c0_40 = arith.constant 0 : index
    %116 = vector.load %arg5[%c0_39, %c0_40] : memref<32x128xf32, #tpu.memory_space<vmem>>, vector<32x128xf32>
    %cst_41 = arith.constant dense<0.000000e+00> : vector<8x128xf32>
    %117 = tpu.matmul %96, %116, %cst_41 {dimension_numbers = #tpu.dot_dimension_numbers<[1], [0], [0], [1], [0, 0, 1, 1], [], []>} : vector<8x32xf32>, vector<32x128xf32>, vector<8x128xf32> -> vector<8x128xf32>
    %118 = arith.addf %115, %117 : vector<8x128xf32>
    %119 = arith.addf %118, %8 : vector<8x128xf32>
    %120 = arith.mulf %119, %17 : vector<8x128xf32>
    %121 = math.tanh %120 : vector<8x128xf32>
    %122 = arith.mulf %17, %121 : vector<8x128xf32>
    %123 = arith.addf %122, %20 : vector<8x128xf32>
    %124 = vector.extract_strided_slice %123 {offsets = [0, 0], sizes = [8, 32], strides = [1, 1]} : vector<8x128xf32> to vector<8x32xf32>
    %125 = vector.extract_strided_slice %123 {offsets = [0, 32], sizes = [8, 32], strides = [1, 1]} : vector<8x128xf32> to vector<8x32xf32>
    %126 = vector.extract_strided_slice %123 {offsets = [0, 64], sizes = [8, 32], strides = [1, 1]} : vector<8x128xf32> to vector<8x32xf32>
    %127 = vector.extract_strided_slice %123 {offsets = [0, 96], sizes = [8, 32], strides = [1, 1]} : vector<8x128xf32> to vector<8x32xf32>
    %128 = arith.mulf %125, %94 : vector<8x32xf32>
    %129 = arith.mulf %124, %126 : vector<8x32xf32>
    %130 = arith.addf %128, %129 : vector<8x32xf32>
    %131 = math.tanh %130 : vector<8x32xf32>
    %132 = arith.mulf %127, %131 : vector<8x32xf32>
    %133 = vector.extract_strided_slice %5 {offsets = [24, 0], sizes = [8, 128], strides = [1, 1]} : vector<64x128xf32> to vector<8x128xf32>
    %c0_42 = arith.constant 0 : index
    %c0_43 = arith.constant 0 : index
    %134 = vector.load %arg3[%c0_42, %c0_43] : memref<32x128xf32, #tpu.memory_space<vmem>>, vector<32x128xf32>
    %cst_44 = arith.constant dense<0.000000e+00> : vector<8x128xf32>
    %135 = tpu.matmul %113, %134, %cst_44 {dimension_numbers = #tpu.dot_dimension_numbers<[1], [0], [0], [1], [0, 0, 1, 1], [], []>} : vector<8x32xf32>, vector<32x128xf32>, vector<8x128xf32> -> vector<8x128xf32>
    %136 = arith.addf %133, %135 : vector<8x128xf32>
    %137 = arith.mulf %136, %17 : vector<8x128xf32>
    %138 = math.tanh %137 : vector<8x128xf32>
    %139 = arith.mulf %17, %138 : vector<8x128xf32>
    %140 = arith.addf %139, %20 : vector<8x128xf32>
    %141 = vector.extract_strided_slice %140 {offsets = [0, 0], sizes = [8, 32], strides = [1, 1]} : vector<8x128xf32> to vector<8x32xf32>
    %142 = vector.extract_strided_slice %140 {offsets = [0, 32], sizes = [8, 32], strides = [1, 1]} : vector<8x128xf32> to vector<8x32xf32>
    %143 = vector.extract_strided_slice %140 {offsets = [0, 64], sizes = [8, 32], strides = [1, 1]} : vector<8x128xf32> to vector<8x32xf32>
    %144 = vector.extract_strided_slice %140 {offsets = [0, 96], sizes = [8, 32], strides = [1, 1]} : vector<8x128xf32> to vector<8x32xf32>
    %145 = arith.mulf %142, %111 : vector<8x32xf32>
    %146 = arith.mulf %141, %143 : vector<8x32xf32>
    %147 = arith.addf %145, %146 : vector<8x32xf32>
    %148 = math.tanh %147 : vector<8x32xf32>
    %149 = arith.mulf %144, %148 : vector<8x32xf32>
    %c0_45 = arith.constant 0 : index
    %c0_46 = arith.constant 0 : index
    %150 = vector.load %arg4[%c0_45, %c0_46] : memref<32x128xf32, #tpu.memory_space<vmem>>, vector<32x128xf32>
    %cst_47 = arith.constant dense<0.000000e+00> : vector<8x128xf32>
    %151 = tpu.matmul %149, %150, %cst_47 {dimension_numbers = #tpu.dot_dimension_numbers<[1], [0], [0], [1], [0, 0, 1, 1], [], []>} : vector<8x32xf32>, vector<32x128xf32>, vector<8x128xf32> -> vector<8x128xf32>
    %c0_48 = arith.constant 0 : index
    %c0_49 = arith.constant 0 : index
    %152 = vector.load %arg5[%c0_48, %c0_49] : memref<32x128xf32, #tpu.memory_space<vmem>>, vector<32x128xf32>
    %cst_50 = arith.constant dense<0.000000e+00> : vector<8x128xf32>
    %153 = tpu.matmul %132, %152, %cst_50 {dimension_numbers = #tpu.dot_dimension_numbers<[1], [0], [0], [1], [0, 0, 1, 1], [], []>} : vector<8x32xf32>, vector<32x128xf32>, vector<8x128xf32> -> vector<8x128xf32>
    %154 = arith.addf %151, %153 : vector<8x128xf32>
    %155 = arith.addf %154, %8 : vector<8x128xf32>
    %156 = arith.mulf %155, %17 : vector<8x128xf32>
    %157 = math.tanh %156 : vector<8x128xf32>
    %158 = arith.mulf %17, %157 : vector<8x128xf32>
    %159 = arith.addf %158, %20 : vector<8x128xf32>
    %160 = vector.extract_strided_slice %159 {offsets = [0, 0], sizes = [8, 32], strides = [1, 1]} : vector<8x128xf32> to vector<8x32xf32>
    %161 = vector.extract_strided_slice %159 {offsets = [0, 32], sizes = [8, 32], strides = [1, 1]} : vector<8x128xf32> to vector<8x32xf32>
    %162 = vector.extract_strided_slice %159 {offsets = [0, 64], sizes = [8, 32], strides = [1, 1]} : vector<8x128xf32> to vector<8x32xf32>
    %163 = vector.extract_strided_slice %159 {offsets = [0, 96], sizes = [8, 32], strides = [1, 1]} : vector<8x128xf32> to vector<8x32xf32>
    %164 = arith.mulf %161, %130 : vector<8x32xf32>
    %165 = arith.mulf %160, %162 : vector<8x32xf32>
    %166 = arith.addf %164, %165 : vector<8x32xf32>
    %167 = math.tanh %166 : vector<8x32xf32>
    %168 = arith.mulf %163, %167 : vector<8x32xf32>
    %169 = vector.extract_strided_slice %5 {offsets = [32, 0], sizes = [8, 128], strides = [1, 1]} : vector<64x128xf32> to vector<8x128xf32>
    %c0_51 = arith.constant 0 : index
    %c0_52 = arith.constant 0 : index
    %170 = vector.load %arg3[%c0_51, %c0_52] : memref<32x128xf32, #tpu.memory_space<vmem>>, vector<32x128xf32>
    %cst_53 = arith.constant dense<0.000000e+00> : vector<8x128xf32>
    %171 = tpu.matmul %149, %170, %cst_53 {dimension_numbers = #tpu.dot_dimension_numbers<[1], [0], [0], [1], [0, 0, 1, 1], [], []>} : vector<8x32xf32>, vector<32x128xf32>, vector<8x128xf32> -> vector<8x128xf32>
    %172 = arith.addf %169, %171 : vector<8x128xf32>
    %173 = arith.mulf %172, %17 : vector<8x128xf32>
    %174 = math.tanh %173 : vector<8x128xf32>
    %175 = arith.mulf %17, %174 : vector<8x128xf32>
    %176 = arith.addf %175, %20 : vector<8x128xf32>
    %177 = vector.extract_strided_slice %176 {offsets = [0, 0], sizes = [8, 32], strides = [1, 1]} : vector<8x128xf32> to vector<8x32xf32>
    %178 = vector.extract_strided_slice %176 {offsets = [0, 32], sizes = [8, 32], strides = [1, 1]} : vector<8x128xf32> to vector<8x32xf32>
    %179 = vector.extract_strided_slice %176 {offsets = [0, 64], sizes = [8, 32], strides = [1, 1]} : vector<8x128xf32> to vector<8x32xf32>
    %180 = vector.extract_strided_slice %176 {offsets = [0, 96], sizes = [8, 32], strides = [1, 1]} : vector<8x128xf32> to vector<8x32xf32>
    %181 = arith.mulf %178, %147 : vector<8x32xf32>
    %182 = arith.mulf %177, %179 : vector<8x32xf32>
    %183 = arith.addf %181, %182 : vector<8x32xf32>
    %184 = math.tanh %183 : vector<8x32xf32>
    %185 = arith.mulf %180, %184 : vector<8x32xf32>
    %c0_54 = arith.constant 0 : index
    %c0_55 = arith.constant 0 : index
    %186 = vector.load %arg4[%c0_54, %c0_55] : memref<32x128xf32, #tpu.memory_space<vmem>>, vector<32x128xf32>
    %cst_56 = arith.constant dense<0.000000e+00> : vector<8x128xf32>
    %187 = tpu.matmul %185, %186, %cst_56 {dimension_numbers = #tpu.dot_dimension_numbers<[1], [0], [0], [1], [0, 0, 1, 1], [], []>} : vector<8x32xf32>, vector<32x128xf32>, vector<8x128xf32> -> vector<8x128xf32>
    %c0_57 = arith.constant 0 : index
    %c0_58 = arith.constant 0 : index
    %188 = vector.load %arg5[%c0_57, %c0_58] : memref<32x128xf32, #tpu.memory_space<vmem>>, vector<32x128xf32>
    %cst_59 = arith.constant dense<0.000000e+00> : vector<8x128xf32>
    %189 = tpu.matmul %168, %188, %cst_59 {dimension_numbers = #tpu.dot_dimension_numbers<[1], [0], [0], [1], [0, 0, 1, 1], [], []>} : vector<8x32xf32>, vector<32x128xf32>, vector<8x128xf32> -> vector<8x128xf32>
    %190 = arith.addf %187, %189 : vector<8x128xf32>
    %191 = arith.addf %190, %8 : vector<8x128xf32>
    %192 = arith.mulf %191, %17 : vector<8x128xf32>
    %193 = math.tanh %192 : vector<8x128xf32>
    %194 = arith.mulf %17, %193 : vector<8x128xf32>
    %195 = arith.addf %194, %20 : vector<8x128xf32>
    %196 = vector.extract_strided_slice %195 {offsets = [0, 0], sizes = [8, 32], strides = [1, 1]} : vector<8x128xf32> to vector<8x32xf32>
    %197 = vector.extract_strided_slice %195 {offsets = [0, 32], sizes = [8, 32], strides = [1, 1]} : vector<8x128xf32> to vector<8x32xf32>
    %198 = vector.extract_strided_slice %195 {offsets = [0, 64], sizes = [8, 32], strides = [1, 1]} : vector<8x128xf32> to vector<8x32xf32>
    %199 = vector.extract_strided_slice %195 {offsets = [0, 96], sizes = [8, 32], strides = [1, 1]} : vector<8x128xf32> to vector<8x32xf32>
    %200 = arith.mulf %197, %166 : vector<8x32xf32>
    %201 = arith.mulf %196, %198 : vector<8x32xf32>
    %202 = arith.addf %200, %201 : vector<8x32xf32>
    %203 = math.tanh %202 : vector<8x32xf32>
    %204 = arith.mulf %199, %203 : vector<8x32xf32>
    %205 = vector.extract_strided_slice %5 {offsets = [40, 0], sizes = [8, 128], strides = [1, 1]} : vector<64x128xf32> to vector<8x128xf32>
    %c0_60 = arith.constant 0 : index
    %c0_61 = arith.constant 0 : index
    %206 = vector.load %arg3[%c0_60, %c0_61] : memref<32x128xf32, #tpu.memory_space<vmem>>, vector<32x128xf32>
    %cst_62 = arith.constant dense<0.000000e+00> : vector<8x128xf32>
    %207 = tpu.matmul %185, %206, %cst_62 {dimension_numbers = #tpu.dot_dimension_numbers<[1], [0], [0], [1], [0, 0, 1, 1], [], []>} : vector<8x32xf32>, vector<32x128xf32>, vector<8x128xf32> -> vector<8x128xf32>
    %208 = arith.addf %205, %207 : vector<8x128xf32>
    %209 = arith.mulf %208, %17 : vector<8x128xf32>
    %210 = math.tanh %209 : vector<8x128xf32>
    %211 = arith.mulf %17, %210 : vector<8x128xf32>
    %212 = arith.addf %211, %20 : vector<8x128xf32>
    %213 = vector.extract_strided_slice %212 {offsets = [0, 0], sizes = [8, 32], strides = [1, 1]} : vector<8x128xf32> to vector<8x32xf32>
    %214 = vector.extract_strided_slice %212 {offsets = [0, 32], sizes = [8, 32], strides = [1, 1]} : vector<8x128xf32> to vector<8x32xf32>
    %215 = vector.extract_strided_slice %212 {offsets = [0, 64], sizes = [8, 32], strides = [1, 1]} : vector<8x128xf32> to vector<8x32xf32>
    %216 = vector.extract_strided_slice %212 {offsets = [0, 96], sizes = [8, 32], strides = [1, 1]} : vector<8x128xf32> to vector<8x32xf32>
    %217 = arith.mulf %214, %183 : vector<8x32xf32>
    %218 = arith.mulf %213, %215 : vector<8x32xf32>
    %219 = arith.addf %217, %218 : vector<8x32xf32>
    %220 = math.tanh %219 : vector<8x32xf32>
    %221 = arith.mulf %216, %220 : vector<8x32xf32>
    %c0_63 = arith.constant 0 : index
    %c0_64 = arith.constant 0 : index
    %222 = vector.load %arg4[%c0_63, %c0_64] : memref<32x128xf32, #tpu.memory_space<vmem>>, vector<32x128xf32>
    %cst_65 = arith.constant dense<0.000000e+00> : vector<8x128xf32>
    %223 = tpu.matmul %221, %222, %cst_65 {dimension_numbers = #tpu.dot_dimension_numbers<[1], [0], [0], [1], [0, 0, 1, 1], [], []>} : vector<8x32xf32>, vector<32x128xf32>, vector<8x128xf32> -> vector<8x128xf32>
    %c0_66 = arith.constant 0 : index
    %c0_67 = arith.constant 0 : index
    %224 = vector.load %arg5[%c0_66, %c0_67] : memref<32x128xf32, #tpu.memory_space<vmem>>, vector<32x128xf32>
    %cst_68 = arith.constant dense<0.000000e+00> : vector<8x128xf32>
    %225 = tpu.matmul %204, %224, %cst_68 {dimension_numbers = #tpu.dot_dimension_numbers<[1], [0], [0], [1], [0, 0, 1, 1], [], []>} : vector<8x32xf32>, vector<32x128xf32>, vector<8x128xf32> -> vector<8x128xf32>
    %226 = arith.addf %223, %225 : vector<8x128xf32>
    %227 = arith.addf %226, %8 : vector<8x128xf32>
    %228 = arith.mulf %227, %17 : vector<8x128xf32>
    %229 = math.tanh %228 : vector<8x128xf32>
    %230 = arith.mulf %17, %229 : vector<8x128xf32>
    %231 = arith.addf %230, %20 : vector<8x128xf32>
    %232 = vector.extract_strided_slice %231 {offsets = [0, 0], sizes = [8, 32], strides = [1, 1]} : vector<8x128xf32> to vector<8x32xf32>
    %233 = vector.extract_strided_slice %231 {offsets = [0, 32], sizes = [8, 32], strides = [1, 1]} : vector<8x128xf32> to vector<8x32xf32>
    %234 = vector.extract_strided_slice %231 {offsets = [0, 64], sizes = [8, 32], strides = [1, 1]} : vector<8x128xf32> to vector<8x32xf32>
    %235 = vector.extract_strided_slice %231 {offsets = [0, 96], sizes = [8, 32], strides = [1, 1]} : vector<8x128xf32> to vector<8x32xf32>
    %236 = arith.mulf %233, %202 : vector<8x32xf32>
    %237 = arith.mulf %232, %234 : vector<8x32xf32>
    %238 = arith.addf %236, %237 : vector<8x32xf32>
    %239 = math.tanh %238 : vector<8x32xf32>
    %240 = arith.mulf %235, %239 : vector<8x32xf32>
    %241 = vector.extract_strided_slice %5 {offsets = [48, 0], sizes = [8, 128], strides = [1, 1]} : vector<64x128xf32> to vector<8x128xf32>
    %c0_69 = arith.constant 0 : index
    %c0_70 = arith.constant 0 : index
    %242 = vector.load %arg3[%c0_69, %c0_70] : memref<32x128xf32, #tpu.memory_space<vmem>>, vector<32x128xf32>
    %cst_71 = arith.constant dense<0.000000e+00> : vector<8x128xf32>
    %243 = tpu.matmul %221, %242, %cst_71 {dimension_numbers = #tpu.dot_dimension_numbers<[1], [0], [0], [1], [0, 0, 1, 1], [], []>} : vector<8x32xf32>, vector<32x128xf32>, vector<8x128xf32> -> vector<8x128xf32>
    %244 = arith.addf %241, %243 : vector<8x128xf32>
    %245 = arith.mulf %244, %17 : vector<8x128xf32>
    %246 = math.tanh %245 : vector<8x128xf32>
    %247 = arith.mulf %17, %246 : vector<8x128xf32>
    %248 = arith.addf %247, %20 : vector<8x128xf32>
    %249 = vector.extract_strided_slice %248 {offsets = [0, 0], sizes = [8, 32], strides = [1, 1]} : vector<8x128xf32> to vector<8x32xf32>
    %250 = vector.extract_strided_slice %248 {offsets = [0, 32], sizes = [8, 32], strides = [1, 1]} : vector<8x128xf32> to vector<8x32xf32>
    %251 = vector.extract_strided_slice %248 {offsets = [0, 64], sizes = [8, 32], strides = [1, 1]} : vector<8x128xf32> to vector<8x32xf32>
    %252 = vector.extract_strided_slice %248 {offsets = [0, 96], sizes = [8, 32], strides = [1, 1]} : vector<8x128xf32> to vector<8x32xf32>
    %253 = arith.mulf %250, %219 : vector<8x32xf32>
    %254 = arith.mulf %249, %251 : vector<8x32xf32>
    %255 = arith.addf %253, %254 : vector<8x32xf32>
    %256 = math.tanh %255 : vector<8x32xf32>
    %257 = arith.mulf %252, %256 : vector<8x32xf32>
    %c0_72 = arith.constant 0 : index
    %c0_73 = arith.constant 0 : index
    %258 = vector.load %arg4[%c0_72, %c0_73] : memref<32x128xf32, #tpu.memory_space<vmem>>, vector<32x128xf32>
    %cst_74 = arith.constant dense<0.000000e+00> : vector<8x128xf32>
    %259 = tpu.matmul %257, %258, %cst_74 {dimension_numbers = #tpu.dot_dimension_numbers<[1], [0], [0], [1], [0, 0, 1, 1], [], []>} : vector<8x32xf32>, vector<32x128xf32>, vector<8x128xf32> -> vector<8x128xf32>
    %c0_75 = arith.constant 0 : index
    %c0_76 = arith.constant 0 : index
    %260 = vector.load %arg5[%c0_75, %c0_76] : memref<32x128xf32, #tpu.memory_space<vmem>>, vector<32x128xf32>
    %cst_77 = arith.constant dense<0.000000e+00> : vector<8x128xf32>
    %261 = tpu.matmul %240, %260, %cst_77 {dimension_numbers = #tpu.dot_dimension_numbers<[1], [0], [0], [1], [0, 0, 1, 1], [], []>} : vector<8x32xf32>, vector<32x128xf32>, vector<8x128xf32> -> vector<8x128xf32>
    %262 = arith.addf %259, %261 : vector<8x128xf32>
    %263 = arith.addf %262, %8 : vector<8x128xf32>
    %264 = arith.mulf %263, %17 : vector<8x128xf32>
    %265 = math.tanh %264 : vector<8x128xf32>
    %266 = arith.mulf %17, %265 : vector<8x128xf32>
    %267 = arith.addf %266, %20 : vector<8x128xf32>
    %268 = vector.extract_strided_slice %267 {offsets = [0, 0], sizes = [8, 32], strides = [1, 1]} : vector<8x128xf32> to vector<8x32xf32>
    %269 = vector.extract_strided_slice %267 {offsets = [0, 32], sizes = [8, 32], strides = [1, 1]} : vector<8x128xf32> to vector<8x32xf32>
    %270 = vector.extract_strided_slice %267 {offsets = [0, 64], sizes = [8, 32], strides = [1, 1]} : vector<8x128xf32> to vector<8x32xf32>
    %271 = vector.extract_strided_slice %267 {offsets = [0, 96], sizes = [8, 32], strides = [1, 1]} : vector<8x128xf32> to vector<8x32xf32>
    %272 = arith.mulf %269, %238 : vector<8x32xf32>
    %273 = arith.mulf %268, %270 : vector<8x32xf32>
    %274 = arith.addf %272, %273 : vector<8x32xf32>
    %275 = math.tanh %274 : vector<8x32xf32>
    %276 = arith.mulf %271, %275 : vector<8x32xf32>
    %277 = vector.extract_strided_slice %5 {offsets = [56, 0], sizes = [8, 128], strides = [1, 1]} : vector<64x128xf32> to vector<8x128xf32>
    %c0_78 = arith.constant 0 : index
    %c0_79 = arith.constant 0 : index
    %278 = vector.load %arg3[%c0_78, %c0_79] : memref<32x128xf32, #tpu.memory_space<vmem>>, vector<32x128xf32>
    %cst_80 = arith.constant dense<0.000000e+00> : vector<8x128xf32>
    %279 = tpu.matmul %257, %278, %cst_80 {dimension_numbers = #tpu.dot_dimension_numbers<[1], [0], [0], [1], [0, 0, 1, 1], [], []>} : vector<8x32xf32>, vector<32x128xf32>, vector<8x128xf32> -> vector<8x128xf32>
    %280 = arith.addf %277, %279 : vector<8x128xf32>
    %281 = arith.mulf %280, %17 : vector<8x128xf32>
    %282 = math.tanh %281 : vector<8x128xf32>
    %283 = arith.mulf %17, %282 : vector<8x128xf32>
    %284 = arith.addf %283, %20 : vector<8x128xf32>
    %285 = vector.extract_strided_slice %284 {offsets = [0, 0], sizes = [8, 32], strides = [1, 1]} : vector<8x128xf32> to vector<8x32xf32>
    %286 = vector.extract_strided_slice %284 {offsets = [0, 32], sizes = [8, 32], strides = [1, 1]} : vector<8x128xf32> to vector<8x32xf32>
    %287 = vector.extract_strided_slice %284 {offsets = [0, 64], sizes = [8, 32], strides = [1, 1]} : vector<8x128xf32> to vector<8x32xf32>
    %288 = vector.extract_strided_slice %284 {offsets = [0, 96], sizes = [8, 32], strides = [1, 1]} : vector<8x128xf32> to vector<8x32xf32>
    %289 = arith.mulf %286, %255 : vector<8x32xf32>
    %290 = arith.mulf %285, %287 : vector<8x32xf32>
    %291 = arith.addf %289, %290 : vector<8x32xf32>
    %292 = math.tanh %291 : vector<8x32xf32>
    %293 = arith.mulf %288, %292 : vector<8x32xf32>
    %c0_81 = arith.constant 0 : index
    %c0_82 = arith.constant 0 : index
    %294 = vector.load %arg4[%c0_81, %c0_82] : memref<32x128xf32, #tpu.memory_space<vmem>>, vector<32x128xf32>
    %cst_83 = arith.constant dense<0.000000e+00> : vector<8x128xf32>
    %295 = tpu.matmul %293, %294, %cst_83 {dimension_numbers = #tpu.dot_dimension_numbers<[1], [0], [0], [1], [0, 0, 1, 1], [], []>} : vector<8x32xf32>, vector<32x128xf32>, vector<8x128xf32> -> vector<8x128xf32>
    %c0_84 = arith.constant 0 : index
    %c0_85 = arith.constant 0 : index
    %296 = vector.load %arg5[%c0_84, %c0_85] : memref<32x128xf32, #tpu.memory_space<vmem>>, vector<32x128xf32>
    %cst_86 = arith.constant dense<0.000000e+00> : vector<8x128xf32>
    %297 = tpu.matmul %276, %296, %cst_86 {dimension_numbers = #tpu.dot_dimension_numbers<[1], [0], [0], [1], [0, 0, 1, 1], [], []>} : vector<8x32xf32>, vector<32x128xf32>, vector<8x128xf32> -> vector<8x128xf32>
    %298 = arith.addf %295, %297 : vector<8x128xf32>
    %299 = arith.addf %298, %8 : vector<8x128xf32>
    %300 = arith.mulf %299, %17 : vector<8x128xf32>
    %301 = math.tanh %300 : vector<8x128xf32>
    %302 = arith.mulf %17, %301 : vector<8x128xf32>
    %303 = arith.addf %302, %20 : vector<8x128xf32>
    %304 = vector.extract_strided_slice %303 {offsets = [0, 0], sizes = [8, 32], strides = [1, 1]} : vector<8x128xf32> to vector<8x32xf32>
    %305 = vector.extract_strided_slice %303 {offsets = [0, 32], sizes = [8, 32], strides = [1, 1]} : vector<8x128xf32> to vector<8x32xf32>
    %306 = vector.extract_strided_slice %303 {offsets = [0, 64], sizes = [8, 32], strides = [1, 1]} : vector<8x128xf32> to vector<8x32xf32>
    %307 = vector.extract_strided_slice %303 {offsets = [0, 96], sizes = [8, 32], strides = [1, 1]} : vector<8x128xf32> to vector<8x32xf32>
    %308 = arith.mulf %305, %274 : vector<8x32xf32>
    %309 = arith.mulf %304, %306 : vector<8x32xf32>
    %310 = arith.addf %308, %309 : vector<8x32xf32>
    %311 = math.tanh %310 : vector<8x32xf32>
    %312 = arith.mulf %307, %311 : vector<8x32xf32>
    %313 = tpu.concatenate %60, %96, %132, %168, %204, %240, %276, %312 in 0 : vector<8x32xf32>, vector<8x32xf32>, vector<8x32xf32>, vector<8x32xf32>, vector<8x32xf32>, vector<8x32xf32>, vector<8x32xf32>, vector<8x32xf32> -> vector<64x32xf32>
    %c0_87 = arith.constant 0 : index
    %c0_88 = arith.constant 0 : index
    %314 = vector.load %arg7[%c0_87, %c0_88] : memref<32x128xf32, #tpu.memory_space<vmem>>, vector<32x128xf32>
    %cst_89 = arith.constant dense<0.000000e+00> : vector<64x128xf32>
    %315 = tpu.matmul %313, %314, %cst_89 {dimension_numbers = #tpu.dot_dimension_numbers<[1], [0], [0], [1], [0, 0, 1, 1], [], []>} : vector<64x32xf32>, vector<32x128xf32>, vector<64x128xf32> -> vector<64x128xf32>
    %c0_90 = arith.constant 0 : index
    %c0_91 = arith.constant 0 : index
    %316 = vector.load %arg8[%c0_90, %c0_91] : memref<1x128xf32, #tpu.memory_space<vmem>>, vector<1x128xf32>
    %317 = vector.broadcast %316 : vector<1x128xf32> to vector<64x128xf32>
    %318 = arith.addf %315, %317 : vector<64x128xf32>
    %c0_92 = arith.constant 0 : index
    %c0_93 = arith.constant 0 : index
    %319 = vector.load %arg9[%c0_92, %c0_93] : memref<64x128xf32, #tpu.memory_space<vmem>>, vector<64x128xf32>
    tpu.vector_store %arg9[%c0_92, %c0_93], %318 {strides = array<i32>} : memref<64x128xf32, #tpu.memory_space<vmem>>, vector<64x128xf32>,
    return
  }
}

</mosaic_0001>

<llo_original>
// kernel: text_generation_forward.1
$region0: #{text_generation_forward.1}
  #allocation0 [shape = 'u32[]', space=smem, size = 0x4, offset = 0x4, fixed_abs, tag = 'smem constant byte address 0x4 - core index']
  #allocation1 [shape = 'u32[144,128]{1,0:T(1,128)}', space=vmem, size = 0x12000, scoped, tag = 'internal scratch']
  %s0 = inlined_call_operand.hbm [shape: f32[64,128], index: 0, kind: input, shape index: {}]
  %s1 = inlined_call_operand.hbm [shape: f32[128,128], index: 1, kind: input, shape index: {}]
  %s2 = inlined_call_operand.vmem [shape: f32[1,128], index: 2, kind: input, shape index: {}]
  %s3 = inlined_call_operand.hbm [shape: f32[32,128], index: 3, kind: input, shape index: {}]
  %s4 = inlined_call_operand.hbm [shape: f32[32,128], index: 4, kind: input, shape index: {}]
  %s5 = inlined_call_operand.hbm [shape: f32[32,128], index: 5, kind: input, shape index: {}]
  %s6 = inlined_call_operand.vmem [shape: f32[1,128], index: 6, kind: input, shape index: {}]
  %s7 = inlined_call_operand.hbm [shape: f32[32,128], index: 7, kind: input, shape index: {}]
  %s8 = inlined_call_operand.vmem [shape: f32[1,128], index: 8, kind: input, shape index: {}]
  %s9 = inlined_call_operand.hbm [shape: f32[64,128], index: 9, kind: output, shape index: {}]
  %s10 = sld [smem:[#allocation0]]
  $region70: #{text_generation_forward.1} parent=0
    _
  %s12 = ssub.s32 1, %s10
  %s13 = scalar_select 0, %s12, %s10
  $region1: #{text_generation_forward.1} parent=0
    #allocation2 [shape = 'u8[32768]{0}', space=vmem, size = 0x8000, scoped, tag = 'input window, operand 0, single buffered']
    #allocation3 [shape = 's32[1]{0}', space=sflag, size = 0x4, scoped, tag = 'scoped memory for text_generation_forward.1']
    #allocation4 [shape = 's32[1]{0}', space=sflag, size = 0x4, scoped, tag = 'scoped memory for text_generation_forward.1']
    #allocation5 [shape = 'u8[65536]{0}', space=vmem, size = 0x10000, scoped, tag = 'input window, operand 1, single buffered']
    #allocation6 [shape = 's32[1]{0}', space=sflag, size = 0x4, scoped, tag = 'scoped memory for text_generation_forward.1']
    #allocation7 [shape = 'u8[16384]{0}', space=vmem, size = 0x4000, scoped, tag = 'input window, operand 3, single buffered']
    #allocation8 [shape = 'u8[16384]{0}', space=vmem, size = 0x4000, scoped, tag = 'input window, operand 4, single buffered']
    #allocation9 [shape = 's32[1]{0}', space=sflag, size = 0x4, scoped, tag = 'scoped memory for text_generation_forward.1']
    #allocation10 [shape = 'u8[16384]{0}', space=vmem, size = 0x4000, scoped, tag = 'input window, operand 5, single buffered']
    #allocation11 [shape = 'u8[16384]{0}', space=vmem, size = 0x4000, scoped, tag = 'input window, operand 7, single buffered']
    #allocation12 [shape = 's32[1]{0}', space=sflag, size = 0x4, scoped, tag = 'scoped memory for text_generation_forward.1']
    #allocation13 [shape = 'u8[32768]{0}', space=vmem, size = 0x8000, scoped, tag = 'output window, operand 0, single buffered']
    %14 = vsyncpa [#allocation3], 0
    %15 = vsyncpa [#allocation6], 0
    %16 = vsyncpa [#allocation9], 0
    %17 = vsyncpa [#allocation12], 0
    %18 = vsyncpa [#allocation4], 0
    // Predicated region
    $region2: #{text_generation_forward.1} parent=1 // pred_check
      _
    $region3: #{text_generation_forward.1} parent=1 // pred_check_branch
      %20 = sbr.rel (0) target = $region5
    $region4: #{text_generation_forward.1} parent=1 // pred_region
      %s22 = ssub.s32 1024, 1024
      %23 = vsyncadd [#allocation3], %s22
      %s24 = sshll.u32 [#allocation2], 4
      %s25 = int_to_ptr.vmem [resolvable:$true] %s24
      %30 = dma.hbm_to_vmem [thread:$0]  %s0, 1024, %s25, [#allocation3], 128, 128, 8
    $region5: #{text_generation_forward.1} parent=1 // pred_fallthru
      _
    // Predicated region
    $region6: #{text_generation_forward.1} parent=1 // pred_check
      _
    $region7: #{text_generation_forward.1} parent=1 // pred_check_branch
      %32 = sbr.rel (0) target = $region9
    $region8: #{text_generation_forward.1} parent=1 // pred_region
      %s34 = ssub.s32 2048, 2048
      %35 = vsyncadd [#allocation6], %s34
      %s36 = sshll.u32 [#allocation5], 4
      %s37 = int_to_ptr.vmem [resolvable:$true] %s36
      %42 = dma.hbm_to_vmem [thread:$0]  %s1, 2048, %s37, [#allocation6], 128, 128, 8
    $region9: #{text_generation_forward.1} parent=1 // pred_fallthru
      _
    // Predicated region
    $region10: #{text_generation_forward.1} parent=1 // pred_check
      _
    $region11: #{text_generation_forward.1} parent=1 // pred_check_branch
      %44 = sbr.rel (0) target = $region13
    $region12: #{text_generation_forward.1} parent=1 // pred_region
      _
    $region13: #{text_generation_forward.1} parent=1 // pred_fallthru
      _
    // Predicated region
    $region14: #{text_generation_forward.1} parent=1 // pred_check
      _
    $region15: #{text_generation_forward.1} parent=1 // pred_check_branch
      %46 = sbr.rel (0) target = $region17
    $region16: #{text_generation_forward.1} parent=1 // pred_region
      %s48 = ssub.s32 512, 512
      %49 = vsyncadd [#allocation6], %s48
      %s50 = sshll.u32 [#allocation7], 4
      %s51 = int_to_ptr.vmem [resolvable:$true] %s50
      %56 = dma.hbm_to_vmem [thread:$0]  %s3, 512, %s51, [#allocation6], 128, 128, 8
    $region17: #{text_generation_forward.1} parent=1 // pred_fallthru
      _
    // Predicated region
    $region18: #{text_generation_forward.1} parent=1 // pred_check
      _
    $region19: #{text_generation_forward.1} parent=1 // pred_check_branch
      %58 = sbr.rel (0) target = $region21
    $region20: #{text_generation_forward.1} parent=1 // pred_region
      %s60 = ssub.s32 512, 512
      %61 = vsyncadd [#allocation9], %s60
      %s62 = sshll.u32 [#allocation8], 4
      %s63 = int_to_ptr.vmem [resolvable:$true] %s62
      %68 = dma.hbm_to_vmem [thread:$0]  %s4, 512, %s63, [#allocation9], 128, 128, 8
    $region21: #{text_generation_forward.1} parent=1 // pred_fallthru
      _
    // Predicated region
    $region22: #{text_generation_forward.1} parent=1 // pred_check
      _
    $region23: #{text_generation_forward.1} parent=1 // pred_check_branch
      %70 = sbr.rel (0) target = $region25
    $region24: #{text_generation_forward.1} parent=1 // pred_region
      %s72 = ssub.s32 512, 512
      %73 = vsyncadd [#allocation9], %s72
      %s74 = sshll.u32 [#allocation10], 4
      %s75 = int_to_ptr.vmem [resolvable:$true] %s74
      %80 = dma.hbm_to_vmem [thread:$0]  %s5, 512, %s75, [#allocation9], 128, 128, 8
    $region25: #{text_generation_forward.1} parent=1 // pred_fallthru
      _
    // Predicated region
    $region26: #{text_generation_forward.1} parent=1 // pred_check
      _
    $region27: #{text_generation_forward.1} parent=1 // pred_check_branch
      %82 = sbr.rel (0) target = $region29
    $region28: #{text_generation_forward.1} parent=1 // pred_region
      _
    $region29: #{text_generation_forward.1} parent=1 // pred_fallthru
      _
    // Predicated region
    $region30: #{text_generation_forward.1} parent=1 // pred_check
      _
    $region31: #{text_generation_forward.1} parent=1 // pred_check_branch
      %84 = sbr.rel (0) target = $region33
    $region32: #{text_generation_forward.1} parent=1 // pred_region
      %s86 = ssub.s32 512, 512
      %87 = vsyncadd [#allocation12], %s86
      %s88 = sshll.u32 [#allocation11], 4
      %s89 = int_to_ptr.vmem [resolvable:$true] %s88
      %94 = dma.hbm_to_vmem [thread:$0]  %s7, 512, %s89, [#allocation12], 128, 128, 8
    $region33: #{text_generation_forward.1} parent=1 // pred_fallthru
      _
    // Predicated region
    $region34: #{text_generation_forward.1} parent=1 // pred_check
      _
    $region35: #{text_generation_forward.1} parent=1 // pred_check_branch
      %96 = sbr.rel (0) target = $region37
    $region36: #{text_generation_forward.1} parent=1 // pred_region
      _
    $region37: #{text_generation_forward.1} parent=1 // pred_fallthru
      _
    // Predicated region
    $region38: #{text_generation_forward.1} parent=1 // pred_check
      _
    $region39: #{text_generation_forward.1} parent=1 // pred_check_branch
      %98 = sbr.rel (0) target = $region41
    $region40: #{text_generation_forward.1} parent=1 // pred_region
      %99 = dma.done [#allocation3], 1024
    $region41: #{text_generation_forward.1} parent=1 // pred_fallthru
      _
    // Predicated region
    $region42: #{text_generation_forward.1} parent=1 // pred_check
      _
    $region43: #{text_generation_forward.1} parent=1 // pred_check_branch
      %101 = sbr.rel (0) target = $region45
    $region44: #{text_generation_forward.1} parent=1 // pred_region
      %102 = dma.done [#allocation6], 2048
    $region45: #{text_generation_forward.1} parent=1 // pred_fallthru
      _
    // Predicated region
    $region46: #{text_generation_forward.1} parent=1 // pred_check
      _
    $region47: #{text_generation_forward.1} parent=1 // pred_check_branch
      %104 = sbr.rel (0) target = $region49
    $region48: #{text_generation_forward.1} parent=1 // pred_region
      %105 = dma.done [#allocation6], 512
    $region49: #{text_generation_forward.1} parent=1 // pred_fallthru
      _
    // Predicated region
    $region50: #{text_generation_forward.1} parent=1 // pred_check
      _
    $region51: #{text_generation_forward.1} parent=1 // pred_check_branch
      %107 = sbr.rel (0) target = $region53
    $region52: #{text_generation_forward.1} parent=1 // pred_region
      %108 = dma.done [#allocation9], 512
    $region53: #{text_generation_forward.1} parent=1 // pred_fallthru
      _
    // Predicated region
    $region54: #{text_generation_forward.1} parent=1 // pred_check
      _
    $region55: #{text_generation_forward.1} parent=1 // pred_check_branch
      %110 = sbr.rel (0) target = $region57
    $region56: #{text_generation_forward.1} parent=1 // pred_region
      %111 = dma.done [#allocation9], 512
    $region57: #{text_generation_forward.1} parent=1 // pred_fallthru
      _
    // Predicated region
    $region58: #{text_generation_forward.1} parent=1 // pred_check
      _
    $region59: #{text_generation_forward.1} parent=1 // pred_check_branch
      %113 = sbr.rel (0) target = $region61
    $region60: #{text_generation_forward.1} parent=1 // pred_region
      %114 = dma.done [#allocation12], 512
    $region61: #{text_generation_forward.1} parent=1 // pred_fallthru
      _
    %v115 = vld [vmem:[#allocation2] sm:$0xff]
    %v116 = vld [vmem:[#allocation2 + $0x8] sm:$0xff]
    %v117 = vld [vmem:[#allocation2 + $0x10] sm:$0xff]
    %v118 = vld [vmem:[#allocation2 + $0x18] sm:$0xff]
    %v119 = vld [vmem:[#allocation2 + $0x20] sm:$0xff]
    %v120 = vld [vmem:[#allocation2 + $0x28] sm:$0xff]
    %v121 = vld [vmem:[#allocation2 + $0x30] sm:$0xff]
    %v122 = vld [vmem:[#allocation2 + $0x38] sm:$0xff]
    %v123 = vld [vmem:[#allocation5] sm:$0xff]
    %v124 = vld [vmem:[#allocation5 + $0x8] sm:$0xff]
    %v125 = vld [vmem:[#allocation5 + $0x10] sm:$0xff]
    %v126 = vld [vmem:[#allocation5 + $0x18] sm:$0xff]
    %v127 = vld [vmem:[#allocation5 + $0x20] sm:$0xff]
    %v128 = vld [vmem:[#allocation5 + $0x28] sm:$0xff]
    %v129 = vld [vmem:[#allocation5 + $0x30] sm:$0xff]
    %v130 = vld [vmem:[#allocation5 + $0x38] sm:$0xff]
    %v131 = vld [vmem:[#allocation5 + $0x40] sm:$0xff]
    %v132 = vld [vmem:[#allocation5 + $0x48] sm:$0xff]
    %v133 = vld [vmem:[#allocation5 + $0x50] sm:$0xff]
    %v134 = vld [vmem:[#allocation5 + $0x58] sm:$0xff]
    %v135 = vld [vmem:[#allocation5 + $0x60] sm:$0xff]
    %v136 = vld [vmem:[#allocation5 + $0x68] sm:$0xff]
    %v137 = vld [vmem:[#allocation5 + $0x70] sm:$0xff]
    %v138 = vld [vmem:[#allocation5 + $0x78] sm:$0xff]
    %v139 = vld [vmem:[%s2] sm:$0x1]
    %v141 = vlaneseq
    %v142 = vshrl.u32 %v141, 7
    %v143 = vsub.s32 0, %v142
    %v144 = vrot.slane %v139, %v143
    %146 = vmatprep.subr.mxu0 0.0
    %147 = vmatpush1.msra.mxu0 %v138
    %148 = vmatprep.subr.mxu0 0.0
    %149 = vmatpush1.msra.mxu0 %v137
    %150 = vmatprep.subr.mxu0 0.0
    %151 = vmatpush1.msra.mxu0 %v136
    %152 = vmatprep.subr.mxu0 0.0
    %153 = vmatpush1.msra.mxu0 %v135
    %154 = vmatprep.subr.mxu0 0.0
    %155 = vmatpush1.msra.mxu0 %v134
    %156 = vmatprep.subr.mxu0 0.0
    %157 = vmatpush1.msra.mxu0 %v133
    %158 = vmatprep.subr.mxu0 0.0
    %159 = vmatpush1.msra.mxu0 %v132
    %160 = vmatprep.subr.mxu0 0.0
    %161 = vmatpush1.msra.mxu0 %v131
    %162 = vmatprep.subr.mxu0 0.0
    %163 = vmatpush1.msra.mxu0 %v130
    %164 = vmatprep.subr.mxu0 0.0
    %165 = vmatpush1.msra.mxu0 %v129
    %166 = vmatprep.subr.mxu0 0.0
    %167 = vmatpush1.msra.mxu0 %v128
    %168 = vmatprep.subr.mxu0 0.0
    %169 = vmatpush1.msra.mxu0 %v127
    %170 = vmatprep.subr.mxu0 0.0
    %171 = vmatpush1.msra.mxu0 %v126
    %172 = vmatprep.subr.mxu0 0.0
    %173 = vmatpush1.msra.mxu0 %v125
    %174 = vmatprep.subr.mxu0 0.0
    %175 = vmatpush1.msra.mxu0 %v124
    %176 = vmatprep.subr.mxu0 0.0
    %177 = vmatpush1.msra.mxu0 %v123
    %178 = vmatprep.subr.mxu0 0.0
    %179 = vmatpush2.msra.mxu0 0.0
    %180 = vmatprep.subr.mxu0 0.0
    %181 = vmatpush2.msra.mxu0 0.0
    %182 = vmatprep.subr.mxu0 0.0
    %183 = vmatpush2.msra.mxu0 0.0
    %184 = vmatprep.subr.mxu0 0.0
    %185 = vmatpush2.msra.mxu0 0.0
    %186 = vmatprep.subr.mxu0 0.0
    %187 = vmatpush2.msra.mxu0 0.0
    %188 = vmatprep.subr.mxu0 0.0
    %189 = vmatpush2.msra.mxu0 0.0
    %190 = vmatprep.subr.mxu0 0.0
    %191 = vmatpush2.msra.mxu0 0.0
    %192 = vmatprep.subr.mxu0 0.0
    %193 = vmatpush2.msra.mxu0 0.0
    %194 = vmatprep.subr.mxu0 0.0
    %195 = vmatpush2.msra.mxu0 0.0
    %196 = vmatprep.subr.mxu0 0.0
    %197 = vmatpush2.msra.mxu0 0.0
    %198 = vmatprep.subr.mxu0 0.0
    %199 = vmatpush2.msra.mxu0 0.0
    %200 = vmatprep.subr.mxu0 0.0
    %201 = vmatpush2.msra.mxu0 0.0
    %202 = vmatprep.subr.mxu0 0.0
    %203 = vmatpush2.msra.mxu0 0.0
    %204 = vmatprep.subr.mxu0 0.0
    %205 = vmatpush2.msra.mxu0 0.0
    %206 = vmatprep.subr.mxu0 0.0
    %207 = vmatpush2.msra.mxu0 0.0
    %208 = vmatprep.subr.mxu0 0.0
    %209 = vmatpush2.msra.mxu0 0.0
    %210 = vmatprep.mubr.f32.mxu0 0.0
    %211 = vmatmul.mubr.f32.gmra.mxu0 %v115
    %v212 = vpop.f32.mrf.mxu0
    %v213 = vadd.f32 %v144, %v212
    %v214 = vpop.f32.mrf.mxu0
    %215 = vmatprep.mubr.f32.mxu0 0.0
    %216 = vmatmul.mubr.f32.gmra.mxu0 %v116
    %v217 = vpop.f32.mrf.mxu0
    %v218 = vadd.f32 %v144, %v217
    %v219 = vpop.f32.mrf.mxu0
    %220 = vmatprep.mubr.f32.mxu0 0.0
    %221 = vmatmul.mubr.f32.gmra.mxu0 %v117
    %v222 = vpop.f32.mrf.mxu0
    %v223 = vadd.f32 %v144, %v222
    %v224 = vpop.f32.mrf.mxu0
    %225 = vmatprep.mubr.f32.mxu0 0.0
    %226 = vmatmul.mubr.f32.gmra.mxu0 %v118
    %v227 = vpop.f32.mrf.mxu0
    %v228 = vadd.f32 %v144, %v227
    %v229 = vpop.f32.mrf.mxu0
    %230 = vmatprep.mubr.f32.mxu0 0.0
    %231 = vmatmul.mubr.f32.gmra.mxu0 %v119
    %v232 = vpop.f32.mrf.mxu0
    %v233 = vadd.f32 %v144, %v232
    %v234 = vpop.f32.mrf.mxu0
    %235 = vmatprep.mubr.f32.mxu0 0.0
    %236 = vmatmul.mubr.f32.gmra.mxu0 %v120
    %v237 = vpop.f32.mrf.mxu0
    %v238 = vadd.f32 %v144, %v237
    %v239 = vpop.f32.mrf.mxu0
    %240 = vmatprep.mubr.f32.mxu0 0.0
    %241 = vmatmul.mubr.f32.gmra.mxu0 %v121
    %v242 = vpop.f32.mrf.mxu0
    %v243 = vadd.f32 %v144, %v242
    %v244 = vpop.f32.mrf.mxu0
    %245 = vmatprep.mubr.f32.mxu0 0.0
    %246 = vmatmul.mubr.f32.gmra.mxu0 %v122
    %v247 = vpop.f32.mrf.mxu0
    %v248 = vadd.f32 %v144, %v247
    %v249 = vpop.f32.mrf.mxu0
    %250 = vdwg.mxu0
    %v251 = vld [vmem:[%s6] sm:$0x1]
    %v253 = vlaneseq
    %v254 = vshrl.u32 %v253, 7
    %v255 = vsub.s32 0, %v254
    %v256 = vrot.slane %v251, %v255
    %v258 = vlaneseq
    %v259 = vand.u32 %v258, 127
    %vm260 = vcmp.ge.s32.totalorder %v259, 64
    %vm261 = vcmp.lt.s32.totalorder %v259, 96
    %vm262 = vmand %vm260, %vm261
    %v263 = vsel %vm262, 1.0, 0.5
    %v264 = vsel %vm262, 0.0, 0.5
    %v265 = vld [vmem:[#allocation7] sm:$0xff]
    %v266 = vld [vmem:[#allocation7 + $0x8] sm:$0xff]
    %v267 = vld [vmem:[#allocation7 + $0x10] sm:$0xff]
    %v268 = vld [vmem:[#allocation7 + $0x18] sm:$0xff]
    %vm269 = vcmask 261120
    %v271 = vsel %vm269, 0.0, 0
    %273 = vmatprep.subr.mxu0 0.0
    %274 = vmatpush1.msra.mxu0 0.0
    %275 = vmatprep.subr.mxu0 0.0
    %276 = vmatpush1.msra.mxu0 0.0
    %277 = vmatprep.subr.mxu0 0.0
    %278 = vmatpush1.msra.mxu0 0.0
    %279 = vmatprep.subr.mxu0 0.0
    %280 = vmatpush1.msra.mxu0 0.0
    %281 = vmatprep.subr.mxu0 0.0
    %282 = vmatpush1.msra.mxu0 0.0
    %283 = vmatprep.subr.mxu0 0.0
    %284 = vmatpush1.msra.mxu0 0.0
    %285 = vmatprep.subr.mxu0 0.0
    %286 = vmatpush1.msra.mxu0 0.0
    %287 = vmatprep.subr.mxu0 0.0
    %288 = vmatpush1.msra.mxu0 0.0
    %289 = vmatprep.subr.mxu0 0.0
    %290 = vmatpush1.msra.mxu0 0.0
    %291 = vmatprep.subr.mxu0 0.0
    %292 = vmatpush1.msra.mxu0 0.0
    %293 = vmatprep.subr.mxu0 0.0
    %294 = vmatpush1.msra.mxu0 0.0
    %295 = vmatprep.subr.mxu0 0.0
    %296 = vmatpush1.msra.mxu0 0.0
    %297 = vmatprep.subr.mxu0 0.0
    %298 = vmatpush1.msra.mxu0 %v268
    %299 = vmatprep.subr.mxu0 0.0
    %300 = vmatpush1.msra.mxu0 %v267
    %301 = vmatprep.subr.mxu0 0.0
    %302 = vmatpush1.msra.mxu0 %v266
    %303 = vmatprep.subr.mxu0 0.0
    %304 = vmatpush1.msra.mxu0 %v265
    %305 = vmatprep.subr.mxu0 0.0
    %306 = vmatpush2.msra.mxu0 0.0
    %307 = vmatprep.subr.mxu0 0.0
    %308 = vmatpush2.msra.mxu0 0.0
    %309 = vmatprep.subr.mxu0 0.0
    %310 = vmatpush2.msra.mxu0 0.0
    %311 = vmatprep.subr.mxu0 0.0
    %312 = vmatpush2.msra.mxu0 0.0
    %313 = vmatprep.subr.mxu0 0.0
    %314 = vmatpush2.msra.mxu0 0.0
    %315 = vmatprep.subr.mxu0 0.0
    %316 = vmatpush2.msra.mxu0 0.0
    %317 = vmatprep.subr.mxu0 0.0
    %318 = vmatpush2.msra.mxu0 0.0
    %319 = vmatprep.subr.mxu0 0.0
    %320 = vmatpush2.msra.mxu0 0.0
    %321 = vmatprep.subr.mxu0 0.0
    %322 = vmatpush2.msra.mxu0 0.0
    %323 = vmatprep.subr.mxu0 0.0
    %324 = vmatpush2.msra.mxu0 0.0
    %325 = vmatprep.subr.mxu0 0.0
    %326 = vmatpush2.msra.mxu0 0.0
    %327 = vmatprep.subr.mxu0 0.0
    %328 = vmatpush2.msra.mxu0 0.0
    %329 = vmatprep.subr.mxu0 0.0
    %330 = vmatpush2.msra.mxu0 0.0
    %331 = vmatprep.subr.mxu0 0.0
    %332 = vmatpush2.msra.mxu0 0.0
    %333 = vmatprep.subr.mxu0 0.0
    %334 = vmatpush2.msra.mxu0 0.0
    %335 = vmatprep.subr.mxu0 0.0
    %336 = vmatpush2.msra.mxu0 0.0
    %337 = vmatprep.mubr.f32.mxu0 0.0
    %338 = vmatmul.mubr.f32.gmra.mxu0 %v271
    %v339 = vpop.f32.mrf.mxu0
    %v340 = vadd.f32 0.0, %v339
    %v341 = vpop.f32.mrf.mxu0
    %342 = vdwg.mxu0
    %v343 = vadd.f32 %v213, %v340
    %v344 = vmul.f32 %v343, %v263
    %v345 = vtanh.pop %v344
    %v346 = vmul.f32 %v263, %v345
    %v347 = vadd.f32 %v346, %v264
    %v348 = vmul.f32 %v347, 0.0
    %350 = vrot.lane.b32.xlu0 %v347, 64
    %v351 = vpop.permute.xlu0 %350
    %v353 = vmul.f32 %v347, %v351
    %355 = vrot.lane.b32.xlu0 %v353, 32
    %v356 = vpop.permute.xlu0 %355
    %v358 = vadd.f32 %v348, %v356
    %v359 = vtanh.pop %v358
    %361 = vrot.lane.b32.xlu0 %v359, 64
    %v362 = vpop.permute.xlu0 %361
    %v364 = vmul.f32 %v347, %v362
    %v365 = vld [vmem:[#allocation8] sm:$0xff]
    %v366 = vld [vmem:[#allocation8 + $0x8] sm:$0xff]
    %v367 = vld [vmem:[#allocation8 + $0x10] sm:$0xff]
    %v368 = vld [vmem:[#allocation8 + $0x18] sm:$0xff]
    %v369 = vld [vmem:[#allocation10] sm:$0xff]
    %v370 = vld [vmem:[#allocation10 + $0x8] sm:$0xff]
    %v371 = vld [vmem:[#allocation10 + $0x10] sm:$0xff]
    %v372 = vld [vmem:[#allocation10 + $0x18] sm:$0xff]
    %373 = vmatprep.subr.mxu0 0.0
    %374 = vmatpush1.msra.mxu0 0.0
    %375 = vmatprep.subr.mxu0 0.0
    %376 = vmatpush1.msra.mxu0 0.0
    %377 = vmatprep.subr.mxu0 0.0
    %378 = vmatpush1.msra.mxu0 0.0
    %379 = vmatprep.subr.mxu0 0.0
    %380 = vmatpush1.msra.mxu0 0.0
    %381 = vmatprep.subr.mxu0 0.0
    %382 = vmatpush1.msra.mxu0 0.0
    %383 = vmatprep.subr.mxu0 0.0
    %384 = vmatpush1.msra.mxu0 0.0
    %385 = vmatprep.subr.mxu0 0.0
    %386 = vmatpush1.msra.mxu0 0.0
    %387 = vmatprep.subr.mxu0 0.0
    %388 = vmatpush1.msra.mxu0 0.0
    %389 = vmatprep.subr.mxu0 0.0
    %390 = vmatpush1.msra.mxu0 0.0
    %391 = vmatprep.subr.mxu0 0.0
    %392 = vmatpush1.msra.mxu0 0.0
    %393 = vmatprep.subr.mxu0 0.0
    %394 = vmatpush1.msra.mxu0 0.0
    %395 = vmatprep.subr.mxu0 0.0
    %396 = vmatpush1.msra.mxu0 0.0
    %397 = vmatprep.subr.mxu0 0.0
    %398 = vmatpush1.msra.mxu0 %v372
    %399 = vmatprep.subr.mxu0 0.0
    %400 = vmatpush1.msra.mxu0 %v371
    %401 = vmatprep.subr.mxu0 0.0
    %402 = vmatpush1.msra.mxu0 %v370
    %403 = vmatprep.subr.mxu0 0.0
    %404 = vmatpush1.msra.mxu0 %v369
    %405 = vmatprep.subr.mxu0 0.0
    %406 = vmatpush2.msra.mxu0 0.0
    %407 = vmatprep.subr.mxu0 0.0
    %408 = vmatpush2.msra.mxu0 0.0
    %409 = vmatprep.subr.mxu0 0.0
    %410 = vmatpush2.msra.mxu0 0.0
    %411 = vmatprep.subr.mxu0 0.0
    %412 = vmatpush2.msra.mxu0 0.0
    %413 = vmatprep.subr.mxu0 0.0
    %414 = vmatpush2.msra.mxu0 0.0
    %415 = vmatprep.subr.mxu0 0.0
    %416 = vmatpush2.msra.mxu0 0.0
    %417 = vmatprep.subr.mxu0 0.0
    %418 = vmatpush2.msra.mxu0 0.0
    %419 = vmatprep.subr.mxu0 0.0
    %420 = vmatpush2.msra.mxu0 0.0
    %421 = vmatprep.subr.mxu0 0.0
    %422 = vmatpush2.msra.mxu0 0.0
    %423 = vmatprep.subr.mxu0 0.0
    %424 = vmatpush2.msra.mxu0 0.0
    %425 = vmatprep.subr.mxu0 0.0
    %426 = vmatpush2.msra.mxu0 0.0
    %427 = vmatprep.subr.mxu0 0.0
    %428 = vmatpush2.msra.mxu0 0.0
    %429 = vmatprep.subr.mxu0 0.0
    %430 = vmatpush2.msra.mxu0 0.0
    %431 = vmatprep.subr.mxu0 0.0
    %432 = vmatpush2.msra.mxu0 0.0
    %433 = vmatprep.subr.mxu0 0.0
    %434 = vmatpush2.msra.mxu0 0.0
    %435 = vmatprep.subr.mxu0 0.0
    %436 = vmatpush2.msra.mxu0 0.0
    %437 = vmatprep.mubr.f32.mxu0 0.0
    %438 = vmatmul.mubr.f32.gmra.mxu0 %v271
    %v439 = vpop.f32.mrf.mxu0
    %v440 = vadd.f32 0.0, %v439
    %v441 = vpop.f32.mrf.mxu0
    %442 = vdwg.mxu0
    %444 = vrot.lane.b32.xlu0 %v364, 32
    %v445 = vpop.permute.xlu0 %444
    %v446 = vsel %vm269, %v445, 0
    %448 = vmatprep.subr.mxu0 0.0
    %449 = vmatpush1.msra.mxu0 0.0
    %450 = vmatprep.subr.mxu0 0.0
    %451 = vmatpush1.msra.mxu0 0.0
    %452 = vmatprep.subr.mxu0 0.0
    %453 = vmatpush1.msra.mxu0 0.0
    %454 = vmatprep.subr.mxu0 0.0
    %455 = vmatpush1.msra.mxu0 0.0
    %456 = vmatprep.subr.mxu0 0.0
    %457 = vmatpush1.msra.mxu0 0.0
    %458 = vmatprep.subr.mxu0 0.0
    %459 = vmatpush1.msra.mxu0 0.0
    %460 = vmatprep.subr.mxu0 0.0
    %461 = vmatpush1.msra.mxu0 0.0
    %462 = vmatprep.subr.mxu0 0.0
    %463 = vmatpush1.msra.mxu0 0.0
    %464 = vmatprep.subr.mxu0 0.0
    %465 = vmatpush1.msra.mxu0 0.0
    %466 = vmatprep.subr.mxu0 0.0
    %467 = vmatpush1.msra.mxu0 0.0
    %468 = vmatprep.subr.mxu0 0.0
    %469 = vmatpush1.msra.mxu0 0.0
    %470 = vmatprep.subr.mxu0 0.0
    %471 = vmatpush1.msra.mxu0 0.0
    %472 = vmatprep.subr.mxu0 0.0
    %473 = vmatpush1.msra.mxu0 %v368
    %474 = vmatprep.subr.mxu0 0.0
    %475 = vmatpush1.msra.mxu0 %v367
    %476 = vmatprep.subr.mxu0 0.0
    %477 = vmatpush1.msra.mxu0 %v366
    %478 = vmatprep.subr.mxu0 0.0
    %479 = vmatpush1.msra.mxu0 %v365
    %480 = vmatprep.subr.mxu0 0.0
    %481 = vmatpush2.msra.mxu0 0.0
    %482 = vmatprep.subr.mxu0 0.0
    %483 = vmatpush2.msra.mxu0 0.0
    %484 = vmatprep.subr.mxu0 0.0
    %485 = vmatpush2.msra.mxu0 0.0
    %486 = vmatprep.subr.mxu0 0.0
    %487 = vmatpush2.msra.mxu0 0.0
    %488 = vmatprep.subr.mxu0 0.0
    %489 = vmatpush2.msra.mxu0 0.0
    %490 = vmatprep.subr.mxu0 0.0
    %491 = vmatpush2.msra.mxu0 0.0
    %492 = vmatprep.subr.mxu0 0.0
    %493 = vmatpush2.msra.mxu0 0.0
    %494 = vmatprep.subr.mxu0 0.0
    %495 = vmatpush2.msra.mxu0 0.0
    %496 = vmatprep.subr.mxu0 0.0
    %497 = vmatpush2.msra.mxu0 0.0
    %498 = vmatprep.subr.mxu0 0.0
    %499 = vmatpush2.msra.mxu0 0.0
    %500 = vmatprep.subr.mxu0 0.0
    %501 = vmatpush2.msra.mxu0 0.0
    %502 = vmatprep.subr.mxu0 0.0
    %503 = vmatpush2.msra.mxu0 0.0
    %504 = vmatprep.subr.mxu0 0.0
    %505 = vmatpush2.msra.mxu0 0.0
    %506 = vmatprep.subr.mxu0 0.0
    %507 = vmatpush2.msra.mxu0 0.0
    %508 = vmatprep.subr.mxu0 0.0
    %509 = vmatpush2.msra.mxu0 0.0
    %510 = vmatprep.subr.mxu0 0.0
    %511 = vmatpush2.msra.mxu0 0.0
    %512 = vmatprep.mubr.f32.mxu0 0.0
    %513 = vmatmul.mubr.f32.gmra.mxu0 %v446
    %v514 = vpop.f32.mrf.mxu0
    %v515 = vadd.f32 %v440, %v514
    %v516 = vpop.f32.mrf.mxu0
    %517 = vdwg.mxu0
    %v518 = vadd.f32 %v515, %v256
    %v519 = vmul.f32 %v518, %v263
    %v520 = vtanh.pop %v519
    %v521 = vmul.f32 %v263, %v520
    %v522 = vadd.f32 %v521, %v264
    %v523 = vmul.f32 %v522, 0.0
    %525 = vrot.lane.b32.xlu0 %v522, 64
    %v526 = vpop.permute.xlu0 %525
    %v528 = vmul.f32 %v522, %v526
    %530 = vrot.lane.b32.xlu0 %v528, 32
    %v531 = vpop.permute.xlu0 %530
    %v533 = vadd.f32 %v523, %v531
    %v534 = vtanh.pop %v533
    %536 = vrot.lane.b32.xlu0 %v534, 64
    %v537 = vpop.permute.xlu0 %536
    %v539 = vmul.f32 %v522, %v537
    %540 = vmatprep.subr.mxu0 0.0
    %541 = vmatpush1.msra.mxu0 0.0
    %542 = vmatprep.subr.mxu0 0.0
    %543 = vmatpush1.msra.mxu0 0.0
    %544 = vmatprep.subr.mxu0 0.0
    %545 = vmatpush1.msra.mxu0 0.0
    %546 = vmatprep.subr.mxu0 0.0
    %547 = vmatpush1.msra.mxu0 0.0
    %548 = vmatprep.subr.mxu0 0.0
    %549 = vmatpush1.msra.mxu0 0.0
    %550 = vmatprep.subr.mxu0 0.0
    %551 = vmatpush1.msra.mxu0 0.0
    %552 = vmatprep.subr.mxu0 0.0
    %553 = vmatpush1.msra.mxu0 0.0
    %554 = vmatprep.subr.mxu0 0.0
    %555 = vmatpush1.msra.mxu0 0.0
    %556 = vmatprep.subr.mxu0 0.0
    %557 = vmatpush1.msra.mxu0 0.0
    %558 = vmatprep.subr.mxu0 0.0
    %559 = vmatpush1.msra.mxu0 0.0
    %560 = vmatprep.subr.mxu0 0.0
    %561 = vmatpush1.msra.mxu0 0.0
    %562 = vmatprep.subr.mxu0 0.0
    %563 = vmatpush1.msra.mxu0 0.0
    %564 = vmatprep.subr.mxu0 0.0
    %565 = vmatpush1.msra.mxu0 %v268
    %566 = vmatprep.subr.mxu0 0.0
    %567 = vmatpush1.msra.mxu0 %v267
    %568 = vmatprep.subr.mxu0 0.0
    %569 = vmatpush1.msra.mxu0 %v266
    %570 = vmatprep.subr.mxu0 0.0
    %571 = vmatpush1.msra.mxu0 %v265
    %572 = vmatprep.subr.mxu0 0.0
    %573 = vmatpush2.msra.mxu0 0.0
    %574 = vmatprep.subr.mxu0 0.0
    %575 = vmatpush2.msra.mxu0 0.0
    %576 = vmatprep.subr.mxu0 0.0
    %577 = vmatpush2.msra.mxu0 0.0
    %578 = vmatprep.subr.mxu0 0.0
    %579 = vmatpush2.msra.mxu0 0.0
    %580 = vmatprep.subr.mxu0 0.0
    %581 = vmatpush2.msra.mxu0 0.0
    %582 = vmatprep.subr.mxu0 0.0
    %583 = vmatpush2.msra.mxu0 0.0
    %584 = vmatprep.subr.mxu0 0.0
    %585 = vmatpush2.msra.mxu0 0.0
    %586 = vmatprep.subr.mxu0 0.0
    %587 = vmatpush2.msra.mxu0 0.0
    %588 = vmatprep.subr.mxu0 0.0
    %589 = vmatpush2.msra.mxu0 0.0
    %590 = vmatprep.subr.mxu0 0.0
    %591 = vmatpush2.msra.mxu0 0.0
    %592 = vmatprep.subr.mxu0 0.0
    %593 = vmatpush2.msra.mxu0 0.0
    %594 = vmatprep.subr.mxu0 0.0
    %595 = vmatpush2.msra.mxu0 0.0
    %596 = vmatprep.subr.mxu0 0.0
    %597 = vmatpush2.msra.mxu0 0.0
    %598 = vmatprep.subr.mxu0 0.0
    %599 = vmatpush2.msra.mxu0 0.0
    %600 = vmatprep.subr.mxu0 0.0
    %601 = vmatpush2.msra.mxu0 0.0
    %602 = vmatprep.subr.mxu0 0.0
    %603 = vmatpush2.msra.mxu0 0.0
    %604 = vmatprep.mubr.f32.mxu0 0.0
    %605 = vmatmul.mubr.f32.gmra.mxu0 %v446
    %v606 = vpop.f32.mrf.mxu0
    %v607 = vadd.f32 0.0, %v606
    %v608 = vpop.f32.mrf.mxu0
    %609 = vdwg.mxu0
    %v610 = vadd.f32 %v218, %v607
    %v611 = vmul.f32 %v610, %v263
    %v612 = vtanh.pop %v611
    %v613 = vmul.f32 %v263, %v612
    %v614 = vadd.f32 %v613, %v264
    %v615 = vmul.f32 %v614, %v358
    %617 = vrot.lane.b32.xlu0 %v614, 64
    %v618 = vpop.permute.xlu0 %617
    %v620 = vmul.f32 %v614, %v618
    %622 = vrot.lane.b32.xlu0 %v620, 32
    %v623 = vpop.permute.xlu0 %622
    %v625 = vadd.f32 %v615, %v623
    %v626 = vtanh.pop %v625
    %628 = vrot.lane.b32.xlu0 %v626, 64
    %v629 = vpop.permute.xlu0 %628
    %v631 = vmul.f32 %v614, %v629
    %633 = vrot.lane.b32.xlu0 %v539, 32
    %v634 = vpop.permute.xlu0 %633
    %v635 = vsel %vm269, %v634, 0
    %637 = vmatprep.subr.mxu0 0.0
    %638 = vmatpush1.msra.mxu0 0.0
    %639 = vmatprep.subr.mxu0 0.0
    %640 = vmatpush1.msra.mxu0 0.0
    %641 = vmatprep.subr.mxu0 0.0
    %642 = vmatpush1.msra.mxu0 0.0
    %643 = vmatprep.subr.mxu0 0.0
    %644 = vmatpush1.msra.mxu0 0.0
    %645 = vmatprep.subr.mxu0 0.0
    %646 = vmatpush1.msra.mxu0 0.0
    %647 = vmatprep.subr.mxu0 0.0
    %648 = vmatpush1.msra.mxu0 0.0
    %649 = vmatprep.subr.mxu0 0.0
    %650 = vmatpush1.msra.mxu0 0.0
    %651 = vmatprep.subr.mxu0 0.0
    %652 = vmatpush1.msra.mxu0 0.0
    %653 = vmatprep.subr.mxu0 0.0
    %654 = vmatpush1.msra.mxu0 0.0
    %655 = vmatprep.subr.mxu0 0.0
    %656 = vmatpush1.msra.mxu0 0.0
    %657 = vmatprep.subr.mxu0 0.0
    %658 = vmatpush1.msra.mxu0 0.0
    %659 = vmatprep.subr.mxu0 0.0
    %660 = vmatpush1.msra.mxu0 0.0
    %661 = vmatprep.subr.mxu0 0.0
    %662 = vmatpush1.msra.mxu0 %v372
    %663 = vmatprep.subr.mxu0 0.0
    %664 = vmatpush1.msra.mxu0 %v371
    %665 = vmatprep.subr.mxu0 0.0
    %666 = vmatpush1.msra.mxu0 %v370
    %667 = vmatprep.subr.mxu0 0.0
    %668 = vmatpush1.msra.mxu0 %v369
    %669 = vmatprep.subr.mxu0 0.0
    %670 = vmatpush2.msra.mxu0 0.0
    %671 = vmatprep.subr.mxu0 0.0
    %672 = vmatpush2.msra.mxu0 0.0
    %673 = vmatprep.subr.mxu0 0.0
    %674 = vmatpush2.msra.mxu0 0.0
    %675 = vmatprep.subr.mxu0 0.0
    %676 = vmatpush2.msra.mxu0 0.0
    %677 = vmatprep.subr.mxu0 0.0
    %678 = vmatpush2.msra.mxu0 0.0
    %679 = vmatprep.subr.mxu0 0.0
    %680 = vmatpush2.msra.mxu0 0.0
    %681 = vmatprep.subr.mxu0 0.0
    %682 = vmatpush2.msra.mxu0 0.0
    %683 = vmatprep.subr.mxu0 0.0
    %684 = vmatpush2.msra.mxu0 0.0
    %685 = vmatprep.subr.mxu0 0.0
    %686 = vmatpush2.msra.mxu0 0.0
    %687 = vmatprep.subr.mxu0 0.0
    %688 = vmatpush2.msra.mxu0 0.0
    %689 = vmatprep.subr.mxu0 0.0
    %690 = vmatpush2.msra.mxu0 0.0
    %691 = vmatprep.subr.mxu0 0.0
    %692 = vmatpush2.msra.mxu0 0.0
    %693 = vmatprep.subr.mxu0 0.0
    %694 = vmatpush2.msra.mxu0 0.0
    %695 = vmatprep.subr.mxu0 0.0
    %696 = vmatpush2.msra.mxu0 0.0
    %697 = vmatprep.subr.mxu0 0.0
    %698 = vmatpush2.msra.mxu0 0.0
    %699 = vmatprep.subr.mxu0 0.0
    %700 = vmatpush2.msra.mxu0 0.0
    %701 = vmatprep.mubr.f32.mxu0 0.0
    %702 = vmatmul.mubr.f32.gmra.mxu0 %v635
    %v703 = vpop.f32.mrf.mxu0
    %v704 = vadd.f32 0.0, %v703
    %v705 = vpop.f32.mrf.mxu0
    %706 = vdwg.mxu0
    %708 = vrot.lane.b32.xlu0 %v631, 32
    %v709 = vpop.permute.xlu0 %708
    %v710 = vsel %vm269, %v709, 0
    %712 = vmatprep.subr.mxu0 0.0
    %713 = vmatpush1.msra.mxu0 0.0
    %714 = vmatprep.subr.mxu0 0.0
    %715 = vmatpush1.msra.mxu0 0.0
    %716 = vmatprep.subr.mxu0 0.0
    %717 = vmatpush1.msra.mxu0 0.0
    %718 = vmatprep.subr.mxu0 0.0
    %719 = vmatpush1.msra.mxu0 0.0
    %720 = vmatprep.subr.mxu0 0.0
    %721 = vmatpush1.msra.mxu0 0.0
    %722 = vmatprep.subr.mxu0 0.0
    %723 = vmatpush1.msra.mxu0 0.0
    %724 = vmatprep.subr.mxu0 0.0
    %725 = vmatpush1.msra.mxu0 0.0
    %726 = vmatprep.subr.mxu0 0.0
    %727 = vmatpush1.msra.mxu0 0.0
    %728 = vmatprep.subr.mxu0 0.0
    %729 = vmatpush1.msra.mxu0 0.0
    %730 = vmatprep.subr.mxu0 0.0
    %731 = vmatpush1.msra.mxu0 0.0
    %732 = vmatprep.subr.mxu0 0.0
    %733 = vmatpush1.msra.mxu0 0.0
    %734 = vmatprep.subr.mxu0 0.0
    %735 = vmatpush1.msra.mxu0 0.0
    %736 = vmatprep.subr.mxu0 0.0
    %737 = vmatpush1.msra.mxu0 %v368
    %738 = vmatprep.subr.mxu0 0.0
    %739 = vmatpush1.msra.mxu0 %v367
    %740 = vmatprep.subr.mxu0 0.0
    %741 = vmatpush1.msra.mxu0 %v366
    %742 = vmatprep.subr.mxu0 0.0
    %743 = vmatpush1.msra.mxu0 %v365
    %744 = vmatprep.subr.mxu0 0.0
    %745 = vmatpush2.msra.mxu0 0.0
    %746 = vmatprep.subr.mxu0 0.0
    %747 = vmatpush2.msra.mxu0 0.0
    %748 = vmatprep.subr.mxu0 0.0
    %749 = vmatpush2.msra.mxu0 0.0
    %750 = vmatprep.subr.mxu0 0.0
    %751 = vmatpush2.msra.mxu0 0.0
    %752 = vmatprep.subr.mxu0 0.0
    %753 = vmatpush2.msra.mxu0 0.0
    %754 = vmatprep.subr.mxu0 0.0
    %755 = vmatpush2.msra.mxu0 0.0
    %756 = vmatprep.subr.mxu0 0.0
    %757 = vmatpush2.msra.mxu0 0.0
    %758 = vmatprep.subr.mxu0 0.0
    %759 = vmatpush2.msra.mxu0 0.0
    %760 = vmatprep.subr.mxu0 0.0
    %761 = vmatpush2.msra.mxu0 0.0
    %762 = vmatprep.subr.mxu0 0.0
    %763 = vmatpush2.msra.mxu0 0.0
    %764 = vmatprep.subr.mxu0 0.0
    %765 = vmatpush2.msra.mxu0 0.0
    %766 = vmatprep.subr.mxu0 0.0
    %767 = vmatpush2.msra.mxu0 0.0
    %768 = vmatprep.subr.mxu0 0.0
    %769 = vmatpush2.msra.mxu0 0.0
    %770 = vmatprep.subr.mxu0 0.0
    %771 = vmatpush2.msra.mxu0 0.0
    %772 = vmatprep.subr.mxu0 0.0
    %773 = vmatpush2.msra.mxu0 0.0
    %774 = vmatprep.subr.mxu0 0.0
    %775 = vmatpush2.msra.mxu0 0.0
    %776 = vmatprep.mubr.f32.mxu0 0.0
    %777 = vmatmul.mubr.f32.gmra.mxu0 %v710
    %v778 = vpop.f32.mrf.mxu0
    %v779 = vadd.f32 %v704, %v778
    %v780 = vpop.f32.mrf.mxu0
    %781 = vdwg.mxu0
    %v782 = vadd.f32 %v779, %v256
    %v783 = vmul.f32 %v782, %v263
    %v784 = vtanh.pop %v783
    %v785 = vmul.f32 %v263, %v784
    %v786 = vadd.f32 %v785, %v264
    %v787 = vmul.f32 %v786, %v533
    %789 = vrot.lane.b32.xlu0 %v786, 64
    %v790 = vpop.permute.xlu0 %789
    %v792 = vmul.f32 %v786, %v790
    %794 = vrot.lane.b32.xlu0 %v792, 32
    %v795 = vpop.permute.xlu0 %794
    %v797 = vadd.f32 %v787, %v795
    %v798 = vtanh.pop %v797
    %800 = vrot.lane.b32.xlu0 %v798, 64
    %v801 = vpop.permute.xlu0 %800
    %v803 = vmul.f32 %v786, %v801
    %804 = vmatprep.subr.mxu0 0.0
    %805 = vmatpush1.msra.mxu0 0.0
    %806 = vmatprep.subr.mxu0 0.0
    %807 = vmatpush1.msra.mxu0 0.0
    %808 = vmatprep.subr.mxu0 0.0
    %809 = vmatpush1.msra.mxu0 0.0
    %810 = vmatprep.subr.mxu0 0.0
    %811 = vmatpush1.msra.mxu0 0.0
    %812 = vmatprep.subr.mxu0 0.0
    %813 = vmatpush1.msra.mxu0 0.0
    %814 = vmatprep.subr.mxu0 0.0
    %815 = vmatpush1.msra.mxu0 0.0
    %816 = vmatprep.subr.mxu0 0.0
    %817 = vmatpush1.msra.mxu0 0.0
    %818 = vmatprep.subr.mxu0 0.0
    %819 = vmatpush1.msra.mxu0 0.0
    %820 = vmatprep.subr.mxu0 0.0
    %821 = vmatpush1.msra.mxu0 0.0
    %822 = vmatprep.subr.mxu0 0.0
    %823 = vmatpush1.msra.mxu0 0.0
    %824 = vmatprep.subr.mxu0 0.0
    %825 = vmatpush1.msra.mxu0 0.0
    %826 = vmatprep.subr.mxu0 0.0
    %827 = vmatpush1.msra.mxu0 0.0
    %828 = vmatprep.subr.mxu0 0.0
    %829 = vmatpush1.msra.mxu0 %v268
    %830 = vmatprep.subr.mxu0 0.0
    %831 = vmatpush1.msra.mxu0 %v267
    %832 = vmatprep.subr.mxu0 0.0
    %833 = vmatpush1.msra.mxu0 %v266
    %834 = vmatprep.subr.mxu0 0.0
    %835 = vmatpush1.msra.mxu0 %v265
    %836 = vmatprep.subr.mxu0 0.0
    %837 = vmatpush2.msra.mxu0 0.0
    %838 = vmatprep.subr.mxu0 0.0
    %839 = vmatpush2.msra.mxu0 0.0
    %840 = vmatprep.subr.mxu0 0.0
    %841 = vmatpush2.msra.mxu0 0.0
    %842 = vmatprep.subr.mxu0 0.0
    %843 = vmatpush2.msra.mxu0 0.0
    %844 = vmatprep.subr.mxu0 0.0
    %845 = vmatpush2.msra.mxu0 0.0
    %846 = vmatprep.subr.mxu0 0.0
    %847 = vmatpush2.msra.mxu0 0.0
    %848 = vmatprep.subr.mxu0 0.0
    %849 = vmatpush2.msra.mxu0 0.0
    %850 = vmatprep.subr.mxu0 0.0
    %851 = vmatpush2.msra.mxu0 0.0
    %852 = vmatprep.subr.mxu0 0.0
    %853 = vmatpush2.msra.mxu0 0.0
    %854 = vmatprep.subr.mxu0 0.0
    %855 = vmatpush2.msra.mxu0 0.0
    %856 = vmatprep.subr.mxu0 0.0
    %857 = vmatpush2.msra.mxu0 0.0
    %858 = vmatprep.subr.mxu0 0.0
    %859 = vmatpush2.msra.mxu0 0.0
    %860 = vmatprep.subr.mxu0 0.0
    %861 = vmatpush2.msra.mxu0 0.0
    %862 = vmatprep.subr.mxu0 0.0
    %863 = vmatpush2.msra.mxu0 0.0
    %864 = vmatprep.subr.mxu0 0.0
    %865 = vmatpush2.msra.mxu0 0.0
    %866 = vmatprep.subr.mxu0 0.0
    %867 = vmatpush2.msra.mxu0 0.0
    %868 = vmatprep.mubr.f32.mxu0 0.0
    %869 = vmatmul.mubr.f32.gmra.mxu0 %v710
    %v870 = vpop.f32.mrf.mxu0
    %v871 = vadd.f32 0.0, %v870
    %v872 = vpop.f32.mrf.mxu0
    %873 = vdwg.mxu0
    %v874 = vadd.f32 %v223, %v871
    %v875 = vmul.f32 %v874, %v263
    %v876 = vtanh.pop %v875
    %v877 = vmul.f32 %v263, %v876
    %v878 = vadd.f32 %v877, %v264
    %v879 = vmul.f32 %v878, %v625
    %881 = vrot.lane.b32.xlu0 %v878, 64
    %v882 = vpop.permute.xlu0 %881
    %v884 = vmul.f32 %v878, %v882
    %886 = vrot.lane.b32.xlu0 %v884, 32
    %v887 = vpop.permute.xlu0 %886
    %v889 = vadd.f32 %v879, %v887
    %v890 = vtanh.pop %v889
    %892 = vrot.lane.b32.xlu0 %v890, 64
    %v893 = vpop.permute.xlu0 %892
    %v895 = vmul.f32 %v878, %v893
    %897 = vrot.lane.b32.xlu0 %v803, 32
    %v898 = vpop.permute.xlu0 %897
    %v899 = vsel %vm269, %v898, 0
    %901 = vmatprep.subr.mxu0 0.0
    %902 = vmatpush1.msra.mxu0 0.0
    %903 = vmatprep.subr.mxu0 0.0
    %904 = vmatpush1.msra.mxu0 0.0
    %905 = vmatprep.subr.mxu0 0.0
    %906 = vmatpush1.msra.mxu0 0.0
    %907 = vmatprep.subr.mxu0 0.0
    %908 = vmatpush1.msra.mxu0 0.0
    %909 = vmatprep.subr.mxu0 0.0
    %910 = vmatpush1.msra.mxu0 0.0
    %911 = vmatprep.subr.mxu0 0.0
    %912 = vmatpush1.msra.mxu0 0.0
    %913 = vmatprep.subr.mxu0 0.0
    %914 = vmatpush1.msra.mxu0 0.0
    %915 = vmatprep.subr.mxu0 0.0
    %916 = vmatpush1.msra.mxu0 0.0
    %917 = vmatprep.subr.mxu0 0.0
    %918 = vmatpush1.msra.mxu0 0.0
    %919 = vmatprep.subr.mxu0 0.0
    %920 = vmatpush1.msra.mxu0 0.0
    %921 = vmatprep.subr.mxu0 0.0
    %922 = vmatpush1.msra.mxu0 0.0
    %923 = vmatprep.subr.mxu0 0.0
    %924 = vmatpush1.msra.mxu0 0.0
    %925 = vmatprep.subr.mxu0 0.0
    %926 = vmatpush1.msra.mxu0 %v372
    %927 = vmatprep.subr.mxu0 0.0
    %928 = vmatpush1.msra.mxu0 %v371
    %929 = vmatprep.subr.mxu0 0.0
    %930 = vmatpush1.msra.mxu0 %v370
    %931 = vmatprep.subr.mxu0 0.0
    %932 = vmatpush1.msra.mxu0 %v369
    %933 = vmatprep.subr.mxu0 0.0
    %934 = vmatpush2.msra.mxu0 0.0
    %935 = vmatprep.subr.mxu0 0.0
    %936 = vmatpush2.msra.mxu0 0.0
    %937 = vmatprep.subr.mxu0 0.0
    %938 = vmatpush2.msra.mxu0 0.0
    %939 = vmatprep.subr.mxu0 0.0
    %940 = vmatpush2.msra.mxu0 0.0
    %941 = vmatprep.subr.mxu0 0.0
    %942 = vmatpush2.msra.mxu0 0.0
    %943 = vmatprep.subr.mxu0 0.0
    %944 = vmatpush2.msra.mxu0 0.0
    %945 = vmatprep.subr.mxu0 0.0
    %946 = vmatpush2.msra.mxu0 0.0
    %947 = vmatprep.subr.mxu0 0.0
    %948 = vmatpush2.msra.mxu0 0.0
    %949 = vmatprep.subr.mxu0 0.0
    %950 = vmatpush2.msra.mxu0 0.0
    %951 = vmatprep.subr.mxu0 0.0
    %952 = vmatpush2.msra.mxu0 0.0
    %953 = vmatprep.subr.mxu0 0.0
    %954 = vmatpush2.msra.mxu0 0.0
    %955 = vmatprep.subr.mxu0 0.0
    %956 = vmatpush2.msra.mxu0 0.0
    %957 = vmatprep.subr.mxu0 0.0
    %958 = vmatpush2.msra.mxu0 0.0
    %959 = vmatprep.subr.mxu0 0.0
    %960 = vmatpush2.msra.mxu0 0.0
    %961 = vmatprep.subr.mxu0 0.0
    %962 = vmatpush2.msra.mxu0 0.0
    %963 = vmatprep.subr.mxu0 0.0
    %964 = vmatpush2.msra.mxu0 0.0
    %965 = vmatprep.mubr.f32.mxu0 0.0
    %966 = vmatmul.mubr.f32.gmra.mxu0 %v899
    %v967 = vpop.f32.mrf.mxu0
    %v968 = vadd.f32 0.0, %v967
    %v969 = vpop.f32.mrf.mxu0
    %970 = vdwg.mxu0
    %972 = vrot.lane.b32.xlu0 %v895, 32
    %v973 = vpop.permute.xlu0 %972
    %v974 = vsel %vm269, %v973, 0
    %976 = vmatprep.subr.mxu0 0.0
    %977 = vmatpush1.msra.mxu0 0.0
    %978 = vmatprep.subr.mxu0 0.0
    %979 = vmatpush1.msra.mxu0 0.0
    %980 = vmatprep.subr.mxu0 0.0
    %981 = vmatpush1.msra.mxu0 0.0
    %982 = vmatprep.subr.mxu0 0.0
    %983 = vmatpush1.msra.mxu0 0.0
    %984 = vmatprep.subr.mxu0 0.0
    %985 = vmatpush1.msra.mxu0 0.0
    %986 = vmatprep.subr.mxu0 0.0
    %987 = vmatpush1.msra.mxu0 0.0
    %988 = vmatprep.subr.mxu0 0.0
    %989 = vmatpush1.msra.mxu0 0.0
    %990 = vmatprep.subr.mxu0 0.0
    %991 = vmatpush1.msra.mxu0 0.0
    %992 = vmatprep.subr.mxu0 0.0
    %993 = vmatpush1.msra.mxu0 0.0
    %994 = vmatprep.subr.mxu0 0.0
    %995 = vmatpush1.msra.mxu0 0.0
    %996 = vmatprep.subr.mxu0 0.0
    %997 = vmatpush1.msra.mxu0 0.0
    %998 = vmatprep.subr.mxu0 0.0
    %999 = vmatpush1.msra.mxu0 0.0
    %1000 = vmatprep.subr.mxu0 0.0
    %1001 = vmatpush1.msra.mxu0 %v368
    %1002 = vmatprep.subr.mxu0 0.0
    %1003 = vmatpush1.msra.mxu0 %v367
    %1004 = vmatprep.subr.mxu0 0.0
    %1005 = vmatpush1.msra.mxu0 %v366
    %1006 = vmatprep.subr.mxu0 0.0
    %1007 = vmatpush1.msra.mxu0 %v365
    %1008 = vmatprep.subr.mxu0 0.0
    %1009 = vmatpush2.msra.mxu0 0.0
    %1010 = vmatprep.subr.mxu0 0.0
    %1011 = vmatpush2.msra.mxu0 0.0
    %1012 = vmatprep.subr.mxu0 0.0
    %1013 = vmatpush2.msra.mxu0 0.0
    %1014 = vmatprep.subr.mxu0 0.0
    %1015 = vmatpush2.msra.mxu0 0.0
    %1016 = vmatprep.subr.mxu0 0.0
    %1017 = vmatpush2.msra.mxu0 0.0
    %1018 = vmatprep.subr.mxu0 0.0
    %1019 = vmatpush2.msra.mxu0 0.0
    %1020 = vmatprep.subr.mxu0 0.0
    %1021 = vmatpush2.msra.mxu0 0.0
    %1022 = vmatprep.subr.mxu0 0.0
    %1023 = vmatpush2.msra.mxu0 0.0
    %1024 = vmatprep.subr.mxu0 0.0
    %1025 = vmatpush2.msra.mxu0 0.0
    %1026 = vmatprep.subr.mxu0 0.0
    %1027 = vmatpush2.msra.mxu0 0.0
    %1028 = vmatprep.subr.mxu0 0.0
    %1029 = vmatpush2.msra.mxu0 0.0
    %1030 = vmatprep.subr.mxu0 0.0
    %1031 = vmatpush2.msra.mxu0 0.0
    %1032 = vmatprep.subr.mxu0 0.0
    %1033 = vmatpush2.msra.mxu0 0.0
    %1034 = vmatprep.subr.mxu0 0.0
    %1035 = vmatpush2.msra.mxu0 0.0
    %1036 = vmatprep.subr.mxu0 0.0
    %1037 = vmatpush2.msra.mxu0 0.0
    %1038 = vmatprep.subr.mxu0 0.0
    %1039 = vmatpush2.msra.mxu0 0.0
    %1040 = vmatprep.mubr.f32.mxu0 0.0
    %1041 = vmatmul.mubr.f32.gmra.mxu0 %v974
    %v1042 = vpop.f32.mrf.mxu0
    %v1043 = vadd.f32 %v968, %v1042
    %v1044 = vpop.f32.mrf.mxu0
    %1045 = vdwg.mxu0
    %v1046 = vadd.f32 %v1043, %v256
    %v1047 = vmul.f32 %v1046, %v263
    %v1048 = vtanh.pop %v1047
    %v1049 = vmul.f32 %v263, %v1048
    %v1050 = vadd.f32 %v1049, %v264
    %v1051 = vmul.f32 %v1050, %v797
    %1053 = vrot.lane.b32.xlu0 %v1050, 64
    %v1054 = vpop.permute.xlu0 %1053
    %v1056 = vmul.f32 %v1050, %v1054
    %1058 = vrot.lane.b32.xlu0 %v1056, 32
    %v1059 = vpop.permute.xlu0 %1058
    %v1061 = vadd.f32 %v1051, %v1059
    %v1062 = vtanh.pop %v1061
    %1064 = vrot.lane.b32.xlu0 %v1062, 64
    %v1065 = vpop.permute.xlu0 %1064
    %v1067 = vmul.f32 %v1050, %v1065
    %1068 = vmatprep.subr.mxu0 0.0
    %1069 = vmatpush1.msra.mxu0 0.0
    %1070 = vmatprep.subr.mxu0 0.0
    %1071 = vmatpush1.msra.mxu0 0.0
    %1072 = vmatprep.subr.mxu0 0.0
    %1073 = vmatpush1.msra.mxu0 0.0
    %1074 = vmatprep.subr.mxu0 0.0
    %1075 = vmatpush1.msra.mxu0 0.0
    %1076 = vmatprep.subr.mxu0 0.0
    %1077 = vmatpush1.msra.mxu0 0.0
    %1078 = vmatprep.subr.mxu0 0.0
    %1079 = vmatpush1.msra.mxu0 0.0
    %1080 = vmatprep.subr.mxu0 0.0
    %1081 = vmatpush1.msra.mxu0 0.0
    %1082 = vmatprep.subr.mxu0 0.0
    %1083 = vmatpush1.msra.mxu0 0.0
    %1084 = vmatprep.subr.mxu0 0.0
    %1085 = vmatpush1.msra.mxu0 0.0
    %1086 = vmatprep.subr.mxu0 0.0
    %1087 = vmatpush1.msra.mxu0 0.0
    %1088 = vmatprep.subr.mxu0 0.0
    %1089 = vmatpush1.msra.mxu0 0.0
    %1090 = vmatprep.subr.mxu0 0.0
    %1091 = vmatpush1.msra.mxu0 0.0
    %1092 = vmatprep.subr.mxu0 0.0
    %1093 = vmatpush1.msra.mxu0 %v268
    %1094 = vmatprep.subr.mxu0 0.0
    %1095 = vmatpush1.msra.mxu0 %v267
    %1096 = vmatprep.subr.mxu0 0.0
    %1097 = vmatpush1.msra.mxu0 %v266
    %1098 = vmatprep.subr.mxu0 0.0
    %1099 = vmatpush1.msra.mxu0 %v265
    %1100 = vmatprep.subr.mxu0 0.0
    %1101 = vmatpush2.msra.mxu0 0.0
    %1102 = vmatprep.subr.mxu0 0.0
    %1103 = vmatpush2.msra.mxu0 0.0
    %1104 = vmatprep.subr.mxu0 0.0
    %1105 = vmatpush2.msra.mxu0 0.0
    %1106 = vmatprep.subr.mxu0 0.0
    %1107 = vmatpush2.msra.mxu0 0.0
    %1108 = vmatprep.subr.mxu0 0.0
    %1109 = vmatpush2.msra.mxu0 0.0
    %1110 = vmatprep.subr.mxu0 0.0
    %1111 = vmatpush2.msra.mxu0 0.0
    %1112 = vmatprep.subr.mxu0 0.0
    %1113 = vmatpush2.msra.mxu0 0.0
    %1114 = vmatprep.subr.mxu0 0.0
    %1115 = vmatpush2.msra.mxu0 0.0
    %1116 = vmatprep.subr.mxu0 0.0
    %1117 = vmatpush2.msra.mxu0 0.0
    %1118 = vmatprep.subr.mxu0 0.0
    %1119 = vmatpush2.msra.mxu0 0.0
    %1120 = vmatprep.subr.mxu0 0.0
    %1121 = vmatpush2.msra.mxu0 0.0
    %1122 = vmatprep.subr.mxu0 0.0
    %1123 = vmatpush2.msra.mxu0 0.0
    %1124 = vmatprep.subr.mxu0 0.0
    %1125 = vmatpush2.msra.mxu0 0.0
    %1126 = vmatprep.subr.mxu0 0.0
    %1127 = vmatpush2.msra.mxu0 0.0
    %1128 = vmatprep.subr.mxu0 0.0
    %1129 = vmatpush2.msra.mxu0 0.0
    %1130 = vmatprep.subr.mxu0 0.0
    %1131 = vmatpush2.msra.mxu0 0.0
    %1132 = vmatprep.mubr.f32.mxu0 0.0
    %1133 = vmatmul.mubr.f32.gmra.mxu0 %v974
    %v1134 = vpop.f32.mrf.mxu0
    %v1135 = vadd.f32 0.0, %v1134
    %v1136 = vpop.f32.mrf.mxu0
    %1137 = vdwg.mxu0
    %v1138 = vadd.f32 %v228, %v1135
    %v1139 = vmul.f32 %v1138, %v263
    %v1140 = vtanh.pop %v1139
    %v1141 = vmul.f32 %v263, %v1140
    %v1142 = vadd.f32 %v1141, %v264
    %v1143 = vmul.f32 %v1142, %v889
    %1145 = vrot.lane.b32.xlu0 %v1142, 64
    %v1146 = vpop.permute.xlu0 %1145
    %v1148 = vmul.f32 %v1142, %v1146
    %1150 = vrot.lane.b32.xlu0 %v1148, 32
    %v1151 = vpop.permute.xlu0 %1150
    %v1153 = vadd.f32 %v1143, %v1151
    %v1154 = vtanh.pop %v1153
    %1156 = vrot.lane.b32.xlu0 %v1154, 64
    %v1157 = vpop.permute.xlu0 %1156
    %v1159 = vmul.f32 %v1142, %v1157
    %1161 = vrot.lane.b32.xlu0 %v1067, 32
    %v1162 = vpop.permute.xlu0 %1161
    %v1163 = vsel %vm269, %v1162, 0
    %1165 = vmatprep.subr.mxu0 0.0
    %1166 = vmatpush1.msra.mxu0 0.0
    %1167 = vmatprep.subr.mxu0 0.0
    %1168 = vmatpush1.msra.mxu0 0.0
    %1169 = vmatprep.subr.mxu0 0.0
    %1170 = vmatpush1.msra.mxu0 0.0
    %1171 = vmatprep.subr.mxu0 0.0
    %1172 = vmatpush1.msra.mxu0 0.0
    %1173 = vmatprep.subr.mxu0 0.0
    %1174 = vmatpush1.msra.mxu0 0.0
    %1175 = vmatprep.subr.mxu0 0.0
    %1176 = vmatpush1.msra.mxu0 0.0
    %1177 = vmatprep.subr.mxu0 0.0
    %1178 = vmatpush1.msra.mxu0 0.0
    %1179 = vmatprep.subr.mxu0 0.0
    %1180 = vmatpush1.msra.mxu0 0.0
    %1181 = vmatprep.subr.mxu0 0.0
    %1182 = vmatpush1.msra.mxu0 0.0
    %1183 = vmatprep.subr.mxu0 0.0
    %1184 = vmatpush1.msra.mxu0 0.0
    %1185 = vmatprep.subr.mxu0 0.0
    %1186 = vmatpush1.msra.mxu0 0.0
    %1187 = vmatprep.subr.mxu0 0.0
    %1188 = vmatpush1.msra.mxu0 0.0
    %1189 = vmatprep.subr.mxu0 0.0
    %1190 = vmatpush1.msra.mxu0 %v372
    %1191 = vmatprep.subr.mxu0 0.0
    %1192 = vmatpush1.msra.mxu0 %v371
    %1193 = vmatprep.subr.mxu0 0.0
    %1194 = vmatpush1.msra.mxu0 %v370
    %1195 = vmatprep.subr.mxu0 0.0
    %1196 = vmatpush1.msra.mxu0 %v369
    %1197 = vmatprep.subr.mxu0 0.0
    %1198 = vmatpush2.msra.mxu0 0.0
    %1199 = vmatprep.subr.mxu0 0.0
    %1200 = vmatpush2.msra.mxu0 0.0
    %1201 = vmatprep.subr.mxu0 0.0
    %1202 = vmatpush2.msra.mxu0 0.0
    %1203 = vmatprep.subr.mxu0 0.0
    %1204 = vmatpush2.msra.mxu0 0.0
    %1205 = vmatprep.subr.mxu0 0.0
    %1206 = vmatpush2.msra.mxu0 0.0
    %1207 = vmatprep.subr.mxu0 0.0
    %1208 = vmatpush2.msra.mxu0 0.0
    %1209 = vmatprep.subr.mxu0 0.0
    %1210 = vmatpush2.msra.mxu0 0.0
    %1211 = vmatprep.subr.mxu0 0.0
    %1212 = vmatpush2.msra.mxu0 0.0
    %1213 = vmatprep.subr.mxu0 0.0
    %1214 = vmatpush2.msra.mxu0 0.0
    %1215 = vmatprep.subr.mxu0 0.0
    %1216 = vmatpush2.msra.mxu0 0.0
    %1217 = vmatprep.subr.mxu0 0.0
    %1218 = vmatpush2.msra.mxu0 0.0
    %1219 = vmatprep.subr.mxu0 0.0
    %1220 = vmatpush2.msra.mxu0 0.0
    %1221 = vmatprep.subr.mxu0 0.0
    %1222 = vmatpush2.msra.mxu0 0.0
    %1223 = vmatprep.subr.mxu0 0.0
    %1224 = vmatpush2.msra.mxu0 0.0
    %1225 = vmatprep.subr.mxu0 0.0
    %1226 = vmatpush2.msra.mxu0 0.0
    %1227 = vmatprep.subr.mxu0 0.0
    %1228 = vmatpush2.msra.mxu0 0.0
    %1229 = vmatprep.mubr.f32.mxu0 0.0
    %1230 = vmatmul.mubr.f32.gmra.mxu0 %v1163
    %v1231 = vpop.f32.mrf.mxu0
    %v1232 = vadd.f32 0.0, %v1231
    %v1233 = vpop.f32.mrf.mxu0
    %1234 = vdwg.mxu0
    %1236 = vrot.lane.b32.xlu0 %v1159, 32
    %v1237 = vpop.permute.xlu0 %1236
    %v1238 = vsel %vm269, %v1237, 0
    %1240 = vmatprep.subr.mxu0 0.0
    %1241 = vmatpush1.msra.mxu0 0.0
    %1242 = vmatprep.subr.mxu0 0.0
    %1243 = vmatpush1.msra.mxu0 0.0
    %1244 = vmatprep.subr.mxu0 0.0
    %1245 = vmatpush1.msra.mxu0 0.0
    %1246 = vmatprep.subr.mxu0 0.0
    %1247 = vmatpush1.msra.mxu0 0.0
    %1248 = vmatprep.subr.mxu0 0.0
    %1249 = vmatpush1.msra.mxu0 0.0
    %1250 = vmatprep.subr.mxu0 0.0
    %1251 = vmatpush1.msra.mxu0 0.0
    %1252 = vmatprep.subr.mxu0 0.0
    %1253 = vmatpush1.msra.mxu0 0.0
    %1254 = vmatprep.subr.mxu0 0.0
    %1255 = vmatpush1.msra.mxu0 0.0
    %1256 = vmatprep.subr.mxu0 0.0
    %1257 = vmatpush1.msra.mxu0 0.0
    %1258 = vmatprep.subr.mxu0 0.0
    %1259 = vmatpush1.msra.mxu0 0.0
    %1260 = vmatprep.subr.mxu0 0.0
    %1261 = vmatpush1.msra.mxu0 0.0
    %1262 = vmatprep.subr.mxu0 0.0
    %1263 = vmatpush1.msra.mxu0 0.0
    %1264 = vmatprep.subr.mxu0 0.0
    %1265 = vmatpush1.msra.mxu0 %v368
    %1266 = vmatprep.subr.mxu0 0.0
    %1267 = vmatpush1.msra.mxu0 %v367
    %1268 = vmatprep.subr.mxu0 0.0
    %1269 = vmatpush1.msra.mxu0 %v366
    %1270 = vmatprep.subr.mxu0 0.0
    %1271 = vmatpush1.msra.mxu0 %v365
    %1272 = vmatprep.subr.mxu0 0.0
    %1273 = vmatpush2.msra.mxu0 0.0
    %1274 = vmatprep.subr.mxu0 0.0
    %1275 = vmatpush2.msra.mxu0 0.0
    %1276 = vmatprep.subr.mxu0 0.0
    %1277 = vmatpush2.msra.mxu0 0.0
    %1278 = vmatprep.subr.mxu0 0.0
    %1279 = vmatpush2.msra.mxu0 0.0
    %1280 = vmatprep.subr.mxu0 0.0
    %1281 = vmatpush2.msra.mxu0 0.0
    %1282 = vmatprep.subr.mxu0 0.0
    %1283 = vmatpush2.msra.mxu0 0.0
    %1284 = vmatprep.subr.mxu0 0.0
    %1285 = vmatpush2.msra.mxu0 0.0
    %1286 = vmatprep.subr.mxu0 0.0
    %1287 = vmatpush2.msra.mxu0 0.0
    %1288 = vmatprep.subr.mxu0 0.0
    %1289 = vmatpush2.msra.mxu0 0.0
    %1290 = vmatprep.subr.mxu0 0.0
    %1291 = vmatpush2.msra.mxu0 0.0
    %1292 = vmatprep.subr.mxu0 0.0
    %1293 = vmatpush2.msra.mxu0 0.0
    %1294 = vmatprep.subr.mxu0 0.0
    %1295 = vmatpush2.msra.mxu0 0.0
    %1296 = vmatprep.subr.mxu0 0.0
    %1297 = vmatpush2.msra.mxu0 0.0
    %1298 = vmatprep.subr.mxu0 0.0
    %1299 = vmatpush2.msra.mxu0 0.0
    %1300 = vmatprep.subr.mxu0 0.0
    %1301 = vmatpush2.msra.mxu0 0.0
    %1302 = vmatprep.subr.mxu0 0.0
    %1303 = vmatpush2.msra.mxu0 0.0
    %1304 = vmatprep.mubr.f32.mxu0 0.0
    %1305 = vmatmul.mubr.f32.gmra.mxu0 %v1238
    %v1306 = vpop.f32.mrf.mxu0
    %v1307 = vadd.f32 %v1232, %v1306
    %v1308 = vpop.f32.mrf.mxu0
    %1309 = vdwg.mxu0
    %v1310 = vadd.f32 %v1307, %v256
    %v1311 = vmul.f32 %v1310, %v263
    %v1312 = vtanh.pop %v1311
    %v1313 = vmul.f32 %v263, %v1312
    %v1314 = vadd.f32 %v1313, %v264
    %v1315 = vmul.f32 %v1314, %v1061
    %1317 = vrot.lane.b32.xlu0 %v1314, 64
    %v1318 = vpop.permute.xlu0 %1317
    %v1320 = vmul.f32 %v1314, %v1318
    %1322 = vrot.lane.b32.xlu0 %v1320, 32
    %v1323 = vpop.permute.xlu0 %1322
    %v1325 = vadd.f32 %v1315, %v1323
    %v1326 = vtanh.pop %v1325
    %1328 = vrot.lane.b32.xlu0 %v1326, 64
    %v1329 = vpop.permute.xlu0 %1328
    %v1331 = vmul.f32 %v1314, %v1329
    %1332 = vmatprep.subr.mxu0 0.0
    %1333 = vmatpush1.msra.mxu0 0.0
    %1334 = vmatprep.subr.mxu0 0.0
    %1335 = vmatpush1.msra.mxu0 0.0
    %1336 = vmatprep.subr.mxu0 0.0
    %1337 = vmatpush1.msra.mxu0 0.0
    %1338 = vmatprep.subr.mxu0 0.0
    %1339 = vmatpush1.msra.mxu0 0.0
    %1340 = vmatprep.subr.mxu0 0.0
    %1341 = vmatpush1.msra.mxu0 0.0
    %1342 = vmatprep.subr.mxu0 0.0
    %1343 = vmatpush1.msra.mxu0 0.0
    %1344 = vmatprep.subr.mxu0 0.0
    %1345 = vmatpush1.msra.mxu0 0.0
    %1346 = vmatprep.subr.mxu0 0.0
    %1347 = vmatpush1.msra.mxu0 0.0
    %1348 = vmatprep.subr.mxu0 0.0
    %1349 = vmatpush1.msra.mxu0 0.0
    %1350 = vmatprep.subr.mxu0 0.0
    %1351 = vmatpush1.msra.mxu0 0.0
    %1352 = vmatprep.subr.mxu0 0.0
    %1353 = vmatpush1.msra.mxu0 0.0
    %1354 = vmatprep.subr.mxu0 0.0
    %1355 = vmatpush1.msra.mxu0 0.0
    %1356 = vmatprep.subr.mxu0 0.0
    %1357 = vmatpush1.msra.mxu0 %v268
    %1358 = vmatprep.subr.mxu0 0.0
    %1359 = vmatpush1.msra.mxu0 %v267
    %1360 = vmatprep.subr.mxu0 0.0
    %1361 = vmatpush1.msra.mxu0 %v266
    %1362 = vmatprep.subr.mxu0 0.0
    %1363 = vmatpush1.msra.mxu0 %v265
    %1364 = vmatprep.subr.mxu0 0.0
    %1365 = vmatpush2.msra.mxu0 0.0
    %1366 = vmatprep.subr.mxu0 0.0
    %1367 = vmatpush2.msra.mxu0 0.0
    %1368 = vmatprep.subr.mxu0 0.0
    %1369 = vmatpush2.msra.mxu0 0.0
    %1370 = vmatprep.subr.mxu0 0.0
    %1371 = vmatpush2.msra.mxu0 0.0
    %1372 = vmatprep.subr.mxu0 0.0
    %1373 = vmatpush2.msra.mxu0 0.0
    %1374 = vmatprep.subr.mxu0 0.0
    %1375 = vmatpush2.msra.mxu0 0.0
    %1376 = vmatprep.subr.mxu0 0.0
    %1377 = vmatpush2.msra.mxu0 0.0
    %1378 = vmatprep.subr.mxu0 0.0
    %1379 = vmatpush2.msra.mxu0 0.0
    %1380 = vmatprep.subr.mxu0 0.0
    %1381 = vmatpush2.msra.mxu0 0.0
    %1382 = vmatprep.subr.mxu0 0.0
    %1383 = vmatpush2.msra.mxu0 0.0
    %1384 = vmatprep.subr.mxu0 0.0
    %1385 = vmatpush2.msra.mxu0 0.0
    %1386 = vmatprep.subr.mxu0 0.0
    %1387 = vmatpush2.msra.mxu0 0.0
    %1388 = vmatprep.subr.mxu0 0.0
    %1389 = vmatpush2.msra.mxu0 0.0
    %1390 = vmatprep.subr.mxu0 0.0
    %1391 = vmatpush2.msra.mxu0 0.0
    %1392 = vmatprep.subr.mxu0 0.0
    %1393 = vmatpush2.msra.mxu0 0.0
    %1394 = vmatprep.subr.mxu0 0.0
    %1395 = vmatpush2.msra.mxu0 0.0
    %1396 = vmatprep.mubr.f32.mxu0 0.0
    %1397 = vmatmul.mubr.f32.gmra.mxu0 %v1238
    %v1398 = vpop.f32.mrf.mxu0
    %v1399 = vadd.f32 0.0, %v1398
    %v1400 = vpop.f32.mrf.mxu0
    %1401 = vdwg.mxu0
    %v1402 = vadd.f32 %v233, %v1399
    %v1403 = vmul.f32 %v1402, %v263
    %v1404 = vtanh.pop %v1403
    %v1405 = vmul.f32 %v263, %v1404
    %v1406 = vadd.f32 %v1405, %v264
    %v1407 = vmul.f32 %v1406, %v1153
    %1409 = vrot.lane.b32.xlu0 %v1406, 64
    %v1410 = vpop.permute.xlu0 %1409
    %v1412 = vmul.f32 %v1406, %v1410
    %1414 = vrot.lane.b32.xlu0 %v1412, 32
    %v1415 = vpop.permute.xlu0 %1414
    %v1417 = vadd.f32 %v1407, %v1415
    %v1418 = vtanh.pop %v1417
    %1420 = vrot.lane.b32.xlu0 %v1418, 64
    %v1421 = vpop.permute.xlu0 %1420
    %v1423 = vmul.f32 %v1406, %v1421
    %1425 = vrot.lane.b32.xlu0 %v1331, 32
    %v1426 = vpop.permute.xlu0 %1425
    %v1427 = vsel %vm269, %v1426, 0
    %1429 = vmatprep.subr.mxu0 0.0
    %1430 = vmatpush1.msra.mxu0 0.0
    %1431 = vmatprep.subr.mxu0 0.0
    %1432 = vmatpush1.msra.mxu0 0.0
    %1433 = vmatprep.subr.mxu0 0.0
    %1434 = vmatpush1.msra.mxu0 0.0
    %1435 = vmatprep.subr.mxu0 0.0
    %1436 = vmatpush1.msra.mxu0 0.0
    %1437 = vmatprep.subr.mxu0 0.0
    %1438 = vmatpush1.msra.mxu0 0.0
    %1439 = vmatprep.subr.mxu0 0.0
    %1440 = vmatpush1.msra.mxu0 0.0
    %1441 = vmatprep.subr.mxu0 0.0
    %1442 = vmatpush1.msra.mxu0 0.0
    %1443 = vmatprep.subr.mxu0 0.0
    %1444 = vmatpush1.msra.mxu0 0.0
    %1445 = vmatprep.subr.mxu0 0.0
    %1446 = vmatpush1.msra.mxu0 0.0
    %1447 = vmatprep.subr.mxu0 0.0
    %1448 = vmatpush1.msra.mxu0 0.0
    %1449 = vmatprep.subr.mxu0 0.0
    %1450 = vmatpush1.msra.mxu0 0.0
    %1451 = vmatprep.subr.mxu0 0.0
    %1452 = vmatpush1.msra.mxu0 0.0
    %1453 = vmatprep.subr.mxu0 0.0
    %1454 = vmatpush1.msra.mxu0 %v372
    %1455 = vmatprep.subr.mxu0 0.0
    %1456 = vmatpush1.msra.mxu0 %v371
    %1457 = vmatprep.subr.mxu0 0.0
    %1458 = vmatpush1.msra.mxu0 %v370
    %1459 = vmatprep.subr.mxu0 0.0
    %1460 = vmatpush1.msra.mxu0 %v369
    %1461 = vmatprep.subr.mxu0 0.0
    %1462 = vmatpush2.msra.mxu0 0.0
    %1463 = vmatprep.subr.mxu0 0.0
    %1464 = vmatpush2.msra.mxu0 0.0
    %1465 = vmatprep.subr.mxu0 0.0
    %1466 = vmatpush2.msra.mxu0 0.0
    %1467 = vmatprep.subr.mxu0 0.0
    %1468 = vmatpush2.msra.mxu0 0.0
    %1469 = vmatprep.subr.mxu0 0.0
    %1470 = vmatpush2.msra.mxu0 0.0
    %1471 = vmatprep.subr.mxu0 0.0
    %1472 = vmatpush2.msra.mxu0 0.0
    %1473 = vmatprep.subr.mxu0 0.0
    %1474 = vmatpush2.msra.mxu0 0.0
    %1475 = vmatprep.subr.mxu0 0.0
    %1476 = vmatpush2.msra.mxu0 0.0
    %1477 = vmatprep.subr.mxu0 0.0
    %1478 = vmatpush2.msra.mxu0 0.0
    %1479 = vmatprep.subr.mxu0 0.0
    %1480 = vmatpush2.msra.mxu0 0.0
    %1481 = vmatprep.subr.mxu0 0.0
    %1482 = vmatpush2.msra.mxu0 0.0
    %1483 = vmatprep.subr.mxu0 0.0
    %1484 = vmatpush2.msra.mxu0 0.0
    %1485 = vmatprep.subr.mxu0 0.0
    %1486 = vmatpush2.msra.mxu0 0.0
    %1487 = vmatprep.subr.mxu0 0.0
    %1488 = vmatpush2.msra.mxu0 0.0
    %1489 = vmatprep.subr.mxu0 0.0
    %1490 = vmatpush2.msra.mxu0 0.0
    %1491 = vmatprep.subr.mxu0 0.0
    %1492 = vmatpush2.msra.mxu0 0.0
    %1493 = vmatprep.mubr.f32.mxu0 0.0
    %1494 = vmatmul.mubr.f32.gmra.mxu0 %v1427
    %v1495 = vpop.f32.mrf.mxu0
    %v1496 = vadd.f32 0.0, %v1495
    %v1497 = vpop.f32.mrf.mxu0
    %1498 = vdwg.mxu0
    %1500 = vrot.lane.b32.xlu0 %v1423, 32
    %v1501 = vpop.permute.xlu0 %1500
    %v1502 = vsel %vm269, %v1501, 0
    %1504 = vmatprep.subr.mxu0 0.0
    %1505 = vmatpush1.msra.mxu0 0.0
    %1506 = vmatprep.subr.mxu0 0.0
    %1507 = vmatpush1.msra.mxu0 0.0
    %1508 = vmatprep.subr.mxu0 0.0
    %1509 = vmatpush1.msra.mxu0 0.0
    %1510 = vmatprep.subr.mxu0 0.0
    %1511 = vmatpush1.msra.mxu0 0.0
    %1512 = vmatprep.subr.mxu0 0.0
    %1513 = vmatpush1.msra.mxu0 0.0
    %1514 = vmatprep.subr.mxu0 0.0
    %1515 = vmatpush1.msra.mxu0 0.0
    %1516 = vmatprep.subr.mxu0 0.0
    %1517 = vmatpush1.msra.mxu0 0.0
    %1518 = vmatprep.subr.mxu0 0.0
    %1519 = vmatpush1.msra.mxu0 0.0
    %1520 = vmatprep.subr.mxu0 0.0
    %1521 = vmatpush1.msra.mxu0 0.0
    %1522 = vmatprep.subr.mxu0 0.0
    %1523 = vmatpush1.msra.mxu0 0.0
    %1524 = vmatprep.subr.mxu0 0.0
    %1525 = vmatpush1.msra.mxu0 0.0
    %1526 = vmatprep.subr.mxu0 0.0
    %1527 = vmatpush1.msra.mxu0 0.0
    %1528 = vmatprep.subr.mxu0 0.0
    %1529 = vmatpush1.msra.mxu0 %v368
    %1530 = vmatprep.subr.mxu0 0.0
    %1531 = vmatpush1.msra.mxu0 %v367
    %1532 = vmatprep.subr.mxu0 0.0
    %1533 = vmatpush1.msra.mxu0 %v366
    %1534 = vmatprep.subr.mxu0 0.0
    %1535 = vmatpush1.msra.mxu0 %v365
    %1536 = vmatprep.subr.mxu0 0.0
    %1537 = vmatpush2.msra.mxu0 0.0
    %1538 = vmatprep.subr.mxu0 0.0
    %1539 = vmatpush2.msra.mxu0 0.0
    %1540 = vmatprep.subr.mxu0 0.0
    %1541 = vmatpush2.msra.mxu0 0.0
    %1542 = vmatprep.subr.mxu0 0.0
    %1543 = vmatpush2.msra.mxu0 0.0
    %1544 = vmatprep.subr.mxu0 0.0
    %1545 = vmatpush2.msra.mxu0 0.0
    %1546 = vmatprep.subr.mxu0 0.0
    %1547 = vmatpush2.msra.mxu0 0.0
    %1548 = vmatprep.subr.mxu0 0.0
    %1549 = vmatpush2.msra.mxu0 0.0
    %1550 = vmatprep.subr.mxu0 0.0
    %1551 = vmatpush2.msra.mxu0 0.0
    %1552 = vmatprep.subr.mxu0 0.0
    %1553 = vmatpush2.msra.mxu0 0.0
    %1554 = vmatprep.subr.mxu0 0.0
    %1555 = vmatpush2.msra.mxu0 0.0
    %1556 = vmatprep.subr.mxu0 0.0
    %1557 = vmatpush2.msra.mxu0 0.0
    %1558 = vmatprep.subr.mxu0 0.0
    %1559 = vmatpush2.msra.mxu0 0.0
    %1560 = vmatprep.subr.mxu0 0.0
    %1561 = vmatpush2.msra.mxu0 0.0
    %1562 = vmatprep.subr.mxu0 0.0
    %1563 = vmatpush2.msra.mxu0 0.0
    %1564 = vmatprep.subr.mxu0 0.0
    %1565 = vmatpush2.msra.mxu0 0.0
    %1566 = vmatprep.subr.mxu0 0.0
    %1567 = vmatpush2.msra.mxu0 0.0
    %1568 = vmatprep.mubr.f32.mxu0 0.0
    %1569 = vmatmul.mubr.f32.gmra.mxu0 %v1502
    %v1570 = vpop.f32.mrf.mxu0
    %v1571 = vadd.f32 %v1496, %v1570
    %v1572 = vpop.f32.mrf.mxu0
    %1573 = vdwg.mxu0
    %v1574 = vadd.f32 %v1571, %v256
    %v1575 = vmul.f32 %v1574, %v263
    %v1576 = vtanh.pop %v1575
    %v1577 = vmul.f32 %v263, %v1576
    %v1578 = vadd.f32 %v1577, %v264
    %v1579 = vmul.f32 %v1578, %v1325
    %1581 = vrot.lane.b32.xlu0 %v1578, 64
    %v1582 = vpop.permute.xlu0 %1581
    %v1584 = vmul.f32 %v1578, %v1582
    %1586 = vrot.lane.b32.xlu0 %v1584, 32
    %v1587 = vpop.permute.xlu0 %1586
    %v1589 = vadd.f32 %v1579, %v1587
    %v1590 = vtanh.pop %v1589
    %1592 = vrot.lane.b32.xlu0 %v1590, 64
    %v1593 = vpop.permute.xlu0 %1592
    %v1595 = vmul.f32 %v1578, %v1593
    %1596 = vmatprep.subr.mxu0 0.0
    %1597 = vmatpush1.msra.mxu0 0.0
    %1598 = vmatprep.subr.mxu0 0.0
    %1599 = vmatpush1.msra.mxu0 0.0
    %1600 = vmatprep.subr.mxu0 0.0
    %1601 = vmatpush1.msra.mxu0 0.0
    %1602 = vmatprep.subr.mxu0 0.0
    %1603 = vmatpush1.msra.mxu0 0.0
    %1604 = vmatprep.subr.mxu0 0.0
    %1605 = vmatpush1.msra.mxu0 0.0
    %1606 = vmatprep.subr.mxu0 0.0
    %1607 = vmatpush1.msra.mxu0 0.0
    %1608 = vmatprep.subr.mxu0 0.0
    %1609 = vmatpush1.msra.mxu0 0.0
    %1610 = vmatprep.subr.mxu0 0.0
    %1611 = vmatpush1.msra.mxu0 0.0
    %1612 = vmatprep.subr.mxu0 0.0
    %1613 = vmatpush1.msra.mxu0 0.0
    %1614 = vmatprep.subr.mxu0 0.0
    %1615 = vmatpush1.msra.mxu0 0.0
    %1616 = vmatprep.subr.mxu0 0.0
    %1617 = vmatpush1.msra.mxu0 0.0
    %1618 = vmatprep.subr.mxu0 0.0
    %1619 = vmatpush1.msra.mxu0 0.0
    %1620 = vmatprep.subr.mxu0 0.0
    %1621 = vmatpush1.msra.mxu0 %v268
    %1622 = vmatprep.subr.mxu0 0.0
    %1623 = vmatpush1.msra.mxu0 %v267
    %1624 = vmatprep.subr.mxu0 0.0
    %1625 = vmatpush1.msra.mxu0 %v266
    %1626 = vmatprep.subr.mxu0 0.0
    %1627 = vmatpush1.msra.mxu0 %v265
    %1628 = vmatprep.subr.mxu0 0.0
    %1629 = vmatpush2.msra.mxu0 0.0
    %1630 = vmatprep.subr.mxu0 0.0
    %1631 = vmatpush2.msra.mxu0 0.0
    %1632 = vmatprep.subr.mxu0 0.0
    %1633 = vmatpush2.msra.mxu0 0.0
    %1634 = vmatprep.subr.mxu0 0.0
    %1635 = vmatpush2.msra.mxu0 0.0
    %1636 = vmatprep.subr.mxu0 0.0
    %1637 = vmatpush2.msra.mxu0 0.0
    %1638 = vmatprep.subr.mxu0 0.0
    %1639 = vmatpush2.msra.mxu0 0.0
    %1640 = vmatprep.subr.mxu0 0.0
    %1641 = vmatpush2.msra.mxu0 0.0
    %1642 = vmatprep.subr.mxu0 0.0
    %1643 = vmatpush2.msra.mxu0 0.0
    %1644 = vmatprep.subr.mxu0 0.0
    %1645 = vmatpush2.msra.mxu0 0.0
    %1646 = vmatprep.subr.mxu0 0.0
    %1647 = vmatpush2.msra.mxu0 0.0
    %1648 = vmatprep.subr.mxu0 0.0
    %1649 = vmatpush2.msra.mxu0 0.0
    %1650 = vmatprep.subr.mxu0 0.0
    %1651 = vmatpush2.msra.mxu0 0.0
    %1652 = vmatprep.subr.mxu0 0.0
    %1653 = vmatpush2.msra.mxu0 0.0
    %1654 = vmatprep.subr.mxu0 0.0
    %1655 = vmatpush2.msra.mxu0 0.0
    %1656 = vmatprep.subr.mxu0 0.0
    %1657 = vmatpush2.msra.mxu0 0.0
    %1658 = vmatprep.subr.mxu0 0.0
    %1659 = vmatpush2.msra.mxu0 0.0
    %1660 = vmatprep.mubr.f32.mxu0 0.0
    %1661 = vmatmul.mubr.f32.gmra.mxu0 %v1502
    %v1662 = vpop.f32.mrf.mxu0
    %v1663 = vadd.f32 0.0, %v1662
    %v1664 = vpop.f32.mrf.mxu0
    %1665 = vdwg.mxu0
    %v1666 = vadd.f32 %v238, %v1663
    %v1667 = vmul.f32 %v1666, %v263
    %v1668 = vtanh.pop %v1667
    %v1669 = vmul.f32 %v263, %v1668
    %v1670 = vadd.f32 %v1669, %v264
    %v1671 = vmul.f32 %v1670, %v1417
    %1673 = vrot.lane.b32.xlu0 %v1670, 64
    %v1674 = vpop.permute.xlu0 %1673
    %v1676 = vmul.f32 %v1670, %v1674
    %1678 = vrot.lane.b32.xlu0 %v1676, 32
    %v1679 = vpop.permute.xlu0 %1678
    %v1681 = vadd.f32 %v1671, %v1679
    %v1682 = vtanh.pop %v1681
    %1684 = vrot.lane.b32.xlu0 %v1682, 64
    %v1685 = vpop.permute.xlu0 %1684
    %v1687 = vmul.f32 %v1670, %v1685
    %1689 = vrot.lane.b32.xlu0 %v1595, 32
    %v1690 = vpop.permute.xlu0 %1689
    %v1691 = vsel %vm269, %v1690, 0
    %1693 = vmatprep.subr.mxu0 0.0
    %1694 = vmatpush1.msra.mxu0 0.0
    %1695 = vmatprep.subr.mxu0 0.0
    %1696 = vmatpush1.msra.mxu0 0.0
    %1697 = vmatprep.subr.mxu0 0.0
    %1698 = vmatpush1.msra.mxu0 0.0
    %1699 = vmatprep.subr.mxu0 0.0
    %1700 = vmatpush1.msra.mxu0 0.0
    %1701 = vmatprep.subr.mxu0 0.0
    %1702 = vmatpush1.msra.mxu0 0.0
    %1703 = vmatprep.subr.mxu0 0.0
    %1704 = vmatpush1.msra.mxu0 0.0
    %1705 = vmatprep.subr.mxu0 0.0
    %1706 = vmatpush1.msra.mxu0 0.0
    %1707 = vmatprep.subr.mxu0 0.0
    %1708 = vmatpush1.msra.mxu0 0.0
    %1709 = vmatprep.subr.mxu0 0.0
    %1710 = vmatpush1.msra.mxu0 0.0
    %1711 = vmatprep.subr.mxu0 0.0
    %1712 = vmatpush1.msra.mxu0 0.0
    %1713 = vmatprep.subr.mxu0 0.0
    %1714 = vmatpush1.msra.mxu0 0.0
    %1715 = vmatprep.subr.mxu0 0.0
    %1716 = vmatpush1.msra.mxu0 0.0
    %1717 = vmatprep.subr.mxu0 0.0
    %1718 = vmatpush1.msra.mxu0 %v372
    %1719 = vmatprep.subr.mxu0 0.0
    %1720 = vmatpush1.msra.mxu0 %v371
    %1721 = vmatprep.subr.mxu0 0.0
    %1722 = vmatpush1.msra.mxu0 %v370
    %1723 = vmatprep.subr.mxu0 0.0
    %1724 = vmatpush1.msra.mxu0 %v369
    %1725 = vmatprep.subr.mxu0 0.0
    %1726 = vmatpush2.msra.mxu0 0.0
    %1727 = vmatprep.subr.mxu0 0.0
    %1728 = vmatpush2.msra.mxu0 0.0
    %1729 = vmatprep.subr.mxu0 0.0
    %1730 = vmatpush2.msra.mxu0 0.0
    %1731 = vmatprep.subr.mxu0 0.0
    %1732 = vmatpush2.msra.mxu0 0.0
    %1733 = vmatprep.subr.mxu0 0.0
    %1734 = vmatpush2.msra.mxu0 0.0
    %1735 = vmatprep.subr.mxu0 0.0
    %1736 = vmatpush2.msra.mxu0 0.0
    %1737 = vmatprep.subr.mxu0 0.0
    %1738 = vmatpush2.msra.mxu0 0.0
    %1739 = vmatprep.subr.mxu0 0.0
    %1740 = vmatpush2.msra.mxu0 0.0
    %1741 = vmatprep.subr.mxu0 0.0
    %1742 = vmatpush2.msra.mxu0 0.0
    %1743 = vmatprep.subr.mxu0 0.0
    %1744 = vmatpush2.msra.mxu0 0.0
    %1745 = vmatprep.subr.mxu0 0.0
    %1746 = vmatpush2.msra.mxu0 0.0
    %1747 = vmatprep.subr.mxu0 0.0
    %1748 = vmatpush2.msra.mxu0 0.0
    %1749 = vmatprep.subr.mxu0 0.0
    %1750 = vmatpush2.msra.mxu0 0.0
    %1751 = vmatprep.subr.mxu0 0.0
    %1752 = vmatpush2.msra.mxu0 0.0
    %1753 = vmatprep.subr.mxu0 0.0
    %1754 = vmatpush2.msra.mxu0 0.0
    %1755 = vmatprep.subr.mxu0 0.0
    %1756 = vmatpush2.msra.mxu0 0.0
    %1757 = vmatprep.mubr.f32.mxu0 0.0
    %1758 = vmatmul.mubr.f32.gmra.mxu0 %v1691
    %v1759 = vpop.f32.mrf.mxu0
    %v1760 = vadd.f32 0.0, %v1759
    %v1761 = vpop.f32.mrf.mxu0
    %1762 = vdwg.mxu0
    %1764 = vrot.lane.b32.xlu0 %v1687, 32
    %v1765 = vpop.permute.xlu0 %1764
    %v1766 = vsel %vm269, %v1765, 0
    %1768 = vmatprep.subr.mxu0 0.0
    %1769 = vmatpush1.msra.mxu0 0.0
    %1770 = vmatprep.subr.mxu0 0.0
    %1771 = vmatpush1.msra.mxu0 0.0
    %1772 = vmatprep.subr.mxu0 0.0
    %1773 = vmatpush1.msra.mxu0 0.0
    %1774 = vmatprep.subr.mxu0 0.0
    %1775 = vmatpush1.msra.mxu0 0.0
    %1776 = vmatprep.subr.mxu0 0.0
    %1777 = vmatpush1.msra.mxu0 0.0
    %1778 = vmatprep.subr.mxu0 0.0
    %1779 = vmatpush1.msra.mxu0 0.0
    %1780 = vmatprep.subr.mxu0 0.0
    %1781 = vmatpush1.msra.mxu0 0.0
    %1782 = vmatprep.subr.mxu0 0.0
    %1783 = vmatpush1.msra.mxu0 0.0
    %1784 = vmatprep.subr.mxu0 0.0
    %1785 = vmatpush1.msra.mxu0 0.0
    %1786 = vmatprep.subr.mxu0 0.0
    %1787 = vmatpush1.msra.mxu0 0.0
    %1788 = vmatprep.subr.mxu0 0.0
    %1789 = vmatpush1.msra.mxu0 0.0
    %1790 = vmatprep.subr.mxu0 0.0
    %1791 = vmatpush1.msra.mxu0 0.0
    %1792 = vmatprep.subr.mxu0 0.0
    %1793 = vmatpush1.msra.mxu0 %v368
    %1794 = vmatprep.subr.mxu0 0.0
    %1795 = vmatpush1.msra.mxu0 %v367
    %1796 = vmatprep.subr.mxu0 0.0
    %1797 = vmatpush1.msra.mxu0 %v366
    %1798 = vmatprep.subr.mxu0 0.0
    %1799 = vmatpush1.msra.mxu0 %v365
    %1800 = vmatprep.subr.mxu0 0.0
    %1801 = vmatpush2.msra.mxu0 0.0
    %1802 = vmatprep.subr.mxu0 0.0
    %1803 = vmatpush2.msra.mxu0 0.0
    %1804 = vmatprep.subr.mxu0 0.0
    %1805 = vmatpush2.msra.mxu0 0.0
    %1806 = vmatprep.subr.mxu0 0.0
    %1807 = vmatpush2.msra.mxu0 0.0
    %1808 = vmatprep.subr.mxu0 0.0
    %1809 = vmatpush2.msra.mxu0 0.0
    %1810 = vmatprep.subr.mxu0 0.0
    %1811 = vmatpush2.msra.mxu0 0.0
    %1812 = vmatprep.subr.mxu0 0.0
    %1813 = vmatpush2.msra.mxu0 0.0
    %1814 = vmatprep.subr.mxu0 0.0
    %1815 = vmatpush2.msra.mxu0 0.0
    %1816 = vmatprep.subr.mxu0 0.0
    %1817 = vmatpush2.msra.mxu0 0.0
    %1818 = vmatprep.subr.mxu0 0.0
    %1819 = vmatpush2.msra.mxu0 0.0
    %1820 = vmatprep.subr.mxu0 0.0
    %1821 = vmatpush2.msra.mxu0 0.0
    %1822 = vmatprep.subr.mxu0 0.0
    %1823 = vmatpush2.msra.mxu0 0.0
    %1824 = vmatprep.subr.mxu0 0.0
    %1825 = vmatpush2.msra.mxu0 0.0
    %1826 = vmatprep.subr.mxu0 0.0
    %1827 = vmatpush2.msra.mxu0 0.0
    %1828 = vmatprep.subr.mxu0 0.0
    %1829 = vmatpush2.msra.mxu0 0.0
    %1830 = vmatprep.subr.mxu0 0.0
    %1831 = vmatpush2.msra.mxu0 0.0
    %1832 = vmatprep.mubr.f32.mxu0 0.0
    %1833 = vmatmul.mubr.f32.gmra.mxu0 %v1766
    %v1834 = vpop.f32.mrf.mxu0
    %v1835 = vadd.f32 %v1760, %v1834
    %v1836 = vpop.f32.mrf.mxu0
    %1837 = vdwg.mxu0
    %v1838 = vadd.f32 %v1835, %v256
    %v1839 = vmul.f32 %v1838, %v263
    %v1840 = vtanh.pop %v1839
    %v1841 = vmul.f32 %v263, %v1840
    %v1842 = vadd.f32 %v1841, %v264
    %v1843 = vmul.f32 %v1842, %v1589
    %1845 = vrot.lane.b32.xlu0 %v1842, 64
    %v1846 = vpop.permute.xlu0 %1845
    %v1848 = vmul.f32 %v1842, %v1846
    %1850 = vrot.lane.b32.xlu0 %v1848, 32
    %v1851 = vpop.permute.xlu0 %1850
    %v1853 = vadd.f32 %v1843, %v1851
    %v1854 = vtanh.pop %v1853
    %1856 = vrot.lane.b32.xlu0 %v1854, 64
    %v1857 = vpop.permute.xlu0 %1856
    %v1859 = vmul.f32 %v1842, %v1857
    %1860 = vmatprep.subr.mxu0 0.0
    %1861 = vmatpush1.msra.mxu0 0.0
    %1862 = vmatprep.subr.mxu0 0.0
    %1863 = vmatpush1.msra.mxu0 0.0
    %1864 = vmatprep.subr.mxu0 0.0
    %1865 = vmatpush1.msra.mxu0 0.0
    %1866 = vmatprep.subr.mxu0 0.0
    %1867 = vmatpush1.msra.mxu0 0.0
    %1868 = vmatprep.subr.mxu0 0.0
    %1869 = vmatpush1.msra.mxu0 0.0
    %1870 = vmatprep.subr.mxu0 0.0
    %1871 = vmatpush1.msra.mxu0 0.0
    %1872 = vmatprep.subr.mxu0 0.0
    %1873 = vmatpush1.msra.mxu0 0.0
    %1874 = vmatprep.subr.mxu0 0.0
    %1875 = vmatpush1.msra.mxu0 0.0
    %1876 = vmatprep.subr.mxu0 0.0
    %1877 = vmatpush1.msra.mxu0 0.0
    %1878 = vmatprep.subr.mxu0 0.0
    %1879 = vmatpush1.msra.mxu0 0.0
    %1880 = vmatprep.subr.mxu0 0.0
    %1881 = vmatpush1.msra.mxu0 0.0
    %1882 = vmatprep.subr.mxu0 0.0
    %1883 = vmatpush1.msra.mxu0 0.0
    %1884 = vmatprep.subr.mxu0 0.0
    %1885 = vmatpush1.msra.mxu0 %v268
    %1886 = vmatprep.subr.mxu0 0.0
    %1887 = vmatpush1.msra.mxu0 %v267
    %1888 = vmatprep.subr.mxu0 0.0
    %1889 = vmatpush1.msra.mxu0 %v266
    %1890 = vmatprep.subr.mxu0 0.0
    %1891 = vmatpush1.msra.mxu0 %v265
    %1892 = vmatprep.subr.mxu0 0.0
    %1893 = vmatpush2.msra.mxu0 0.0
    %1894 = vmatprep.subr.mxu0 0.0
    %1895 = vmatpush2.msra.mxu0 0.0
    %1896 = vmatprep.subr.mxu0 0.0
    %1897 = vmatpush2.msra.mxu0 0.0
    %1898 = vmatprep.subr.mxu0 0.0
    %1899 = vmatpush2.msra.mxu0 0.0
    %1900 = vmatprep.subr.mxu0 0.0
    %1901 = vmatpush2.msra.mxu0 0.0
    %1902 = vmatprep.subr.mxu0 0.0
    %1903 = vmatpush2.msra.mxu0 0.0
    %1904 = vmatprep.subr.mxu0 0.0
    %1905 = vmatpush2.msra.mxu0 0.0
    %1906 = vmatprep.subr.mxu0 0.0
    %1907 = vmatpush2.msra.mxu0 0.0
    %1908 = vmatprep.subr.mxu0 0.0
    %1909 = vmatpush2.msra.mxu0 0.0
    %1910 = vmatprep.subr.mxu0 0.0
    %1911 = vmatpush2.msra.mxu0 0.0
    %1912 = vmatprep.subr.mxu0 0.0
    %1913 = vmatpush2.msra.mxu0 0.0
    %1914 = vmatprep.subr.mxu0 0.0
    %1915 = vmatpush2.msra.mxu0 0.0
    %1916 = vmatprep.subr.mxu0 0.0
    %1917 = vmatpush2.msra.mxu0 0.0
    %1918 = vmatprep.subr.mxu0 0.0
    %1919 = vmatpush2.msra.mxu0 0.0
    %1920 = vmatprep.subr.mxu0 0.0
    %1921 = vmatpush2.msra.mxu0 0.0
    %1922 = vmatprep.subr.mxu0 0.0
    %1923 = vmatpush2.msra.mxu0 0.0
    %1924 = vmatprep.mubr.f32.mxu0 0.0
    %1925 = vmatmul.mubr.f32.gmra.mxu0 %v1766
    %v1926 = vpop.f32.mrf.mxu0
    %v1927 = vadd.f32 0.0, %v1926
    %v1928 = vpop.f32.mrf.mxu0
    %1929 = vdwg.mxu0
    %v1930 = vadd.f32 %v243, %v1927
    %v1931 = vmul.f32 %v1930, %v263
    %v1932 = vtanh.pop %v1931
    %v1933 = vmul.f32 %v263, %v1932
    %v1934 = vadd.f32 %v1933, %v264
    %v1935 = vmul.f32 %v1934, %v1681
    %1937 = vrot.lane.b32.xlu0 %v1934, 64
    %v1938 = vpop.permute.xlu0 %1937
    %v1940 = vmul.f32 %v1934, %v1938
    %1942 = vrot.lane.b32.xlu0 %v1940, 32
    %v1943 = vpop.permute.xlu0 %1942
    %v1945 = vadd.f32 %v1935, %v1943
    %v1946 = vtanh.pop %v1945
    %1948 = vrot.lane.b32.xlu0 %v1946, 64
    %v1949 = vpop.permute.xlu0 %1948
    %v1951 = vmul.f32 %v1934, %v1949
    %1953 = vrot.lane.b32.xlu0 %v1859, 32
    %v1954 = vpop.permute.xlu0 %1953
    %v1955 = vsel %vm269, %v1954, 0
    %1957 = vmatprep.subr.mxu0 0.0
    %1958 = vmatpush1.msra.mxu0 0.0
    %1959 = vmatprep.subr.mxu0 0.0
    %1960 = vmatpush1.msra.mxu0 0.0
    %1961 = vmatprep.subr.mxu0 0.0
    %1962 = vmatpush1.msra.mxu0 0.0
    %1963 = vmatprep.subr.mxu0 0.0
    %1964 = vmatpush1.msra.mxu0 0.0
    %1965 = vmatprep.subr.mxu0 0.0
    %1966 = vmatpush1.msra.mxu0 0.0
    %1967 = vmatprep.subr.mxu0 0.0
    %1968 = vmatpush1.msra.mxu0 0.0
    %1969 = vmatprep.subr.mxu0 0.0
    %1970 = vmatpush1.msra.mxu0 0.0
    %1971 = vmatprep.subr.mxu0 0.0
    %1972 = vmatpush1.msra.mxu0 0.0
    %1973 = vmatprep.subr.mxu0 0.0
    %1974 = vmatpush1.msra.mxu0 0.0
    %1975 = vmatprep.subr.mxu0 0.0
    %1976 = vmatpush1.msra.mxu0 0.0
    %1977 = vmatprep.subr.mxu0 0.0
    %1978 = vmatpush1.msra.mxu0 0.0
    %1979 = vmatprep.subr.mxu0 0.0
    %1980 = vmatpush1.msra.mxu0 0.0
    %1981 = vmatprep.subr.mxu0 0.0
    %1982 = vmatpush1.msra.mxu0 %v372
    %1983 = vmatprep.subr.mxu0 0.0
    %1984 = vmatpush1.msra.mxu0 %v371
    %1985 = vmatprep.subr.mxu0 0.0
    %1986 = vmatpush1.msra.mxu0 %v370
    %1987 = vmatprep.subr.mxu0 0.0
    %1988 = vmatpush1.msra.mxu0 %v369
    %1989 = vmatprep.subr.mxu0 0.0
    %1990 = vmatpush2.msra.mxu0 0.0
    %1991 = vmatprep.subr.mxu0 0.0
    %1992 = vmatpush2.msra.mxu0 0.0
    %1993 = vmatprep.subr.mxu0 0.0
    %1994 = vmatpush2.msra.mxu0 0.0
    %1995 = vmatprep.subr.mxu0 0.0
    %1996 = vmatpush2.msra.mxu0 0.0
    %1997 = vmatprep.subr.mxu0 0.0
    %1998 = vmatpush2.msra.mxu0 0.0
    %1999 = vmatprep.subr.mxu0 0.0
    %2000 = vmatpush2.msra.mxu0 0.0
    %2001 = vmatprep.subr.mxu0 0.0
    %2002 = vmatpush2.msra.mxu0 0.0
    %2003 = vmatprep.subr.mxu0 0.0
    %2004 = vmatpush2.msra.mxu0 0.0
    %2005 = vmatprep.subr.mxu0 0.0
    %2006 = vmatpush2.msra.mxu0 0.0
    %2007 = vmatprep.subr.mxu0 0.0
    %2008 = vmatpush2.msra.mxu0 0.0
    %2009 = vmatprep.subr.mxu0 0.0
    %2010 = vmatpush2.msra.mxu0 0.0
    %2011 = vmatprep.subr.mxu0 0.0
    %2012 = vmatpush2.msra.mxu0 0.0
    %2013 = vmatprep.subr.mxu0 0.0
    %2014 = vmatpush2.msra.mxu0 0.0
    %2015 = vmatprep.subr.mxu0 0.0
    %2016 = vmatpush2.msra.mxu0 0.0
    %2017 = vmatprep.subr.mxu0 0.0
    %2018 = vmatpush2.msra.mxu0 0.0
    %2019 = vmatprep.subr.mxu0 0.0
    %2020 = vmatpush2.msra.mxu0 0.0
    %2021 = vmatprep.mubr.f32.mxu0 0.0
    %2022 = vmatmul.mubr.f32.gmra.mxu0 %v1955
    %v2023 = vpop.f32.mrf.mxu0
    %v2024 = vadd.f32 0.0, %v2023
    %v2025 = vpop.f32.mrf.mxu0
    %2026 = vdwg.mxu0
    %2028 = vrot.lane.b32.xlu0 %v1951, 32
    %v2029 = vpop.permute.xlu0 %2028
    %v2030 = vsel %vm269, %v2029, 0
    %2032 = vmatprep.subr.mxu0 0.0
    %2033 = vmatpush1.msra.mxu0 0.0
    %2034 = vmatprep.subr.mxu0 0.0
    %2035 = vmatpush1.msra.mxu0 0.0
    %2036 = vmatprep.subr.mxu0 0.0
    %2037 = vmatpush1.msra.mxu0 0.0
    %2038 = vmatprep.subr.mxu0 0.0
    %2039 = vmatpush1.msra.mxu0 0.0
    %2040 = vmatprep.subr.mxu0 0.0
    %2041 = vmatpush1.msra.mxu0 0.0
    %2042 = vmatprep.subr.mxu0 0.0
    %2043 = vmatpush1.msra.mxu0 0.0
    %2044 = vmatprep.subr.mxu0 0.0
    %2045 = vmatpush1.msra.mxu0 0.0
    %2046 = vmatprep.subr.mxu0 0.0
    %2047 = vmatpush1.msra.mxu0 0.0
    %2048 = vmatprep.subr.mxu0 0.0
    %2049 = vmatpush1.msra.mxu0 0.0
    %2050 = vmatprep.subr.mxu0 0.0
    %2051 = vmatpush1.msra.mxu0 0.0
    %2052 = vmatprep.subr.mxu0 0.0
    %2053 = vmatpush1.msra.mxu0 0.0
    %2054 = vmatprep.subr.mxu0 0.0
    %2055 = vmatpush1.msra.mxu0 0.0
    %2056 = vmatprep.subr.mxu0 0.0
    %2057 = vmatpush1.msra.mxu0 %v368
    %2058 = vmatprep.subr.mxu0 0.0
    %2059 = vmatpush1.msra.mxu0 %v367
    %2060 = vmatprep.subr.mxu0 0.0
    %2061 = vmatpush1.msra.mxu0 %v366
    %2062 = vmatprep.subr.mxu0 0.0
    %2063 = vmatpush1.msra.mxu0 %v365
    %2064 = vmatprep.subr.mxu0 0.0
    %2065 = vmatpush2.msra.mxu0 0.0
    %2066 = vmatprep.subr.mxu0 0.0
    %2067 = vmatpush2.msra.mxu0 0.0
    %2068 = vmatprep.subr.mxu0 0.0
    %2069 = vmatpush2.msra.mxu0 0.0
    %2070 = vmatprep.subr.mxu0 0.0
    %2071 = vmatpush2.msra.mxu0 0.0
    %2072 = vmatprep.subr.mxu0 0.0
    %2073 = vmatpush2.msra.mxu0 0.0
    %2074 = vmatprep.subr.mxu0 0.0
    %2075 = vmatpush2.msra.mxu0 0.0
    %2076 = vmatprep.subr.mxu0 0.0
    %2077 = vmatpush2.msra.mxu0 0.0
    %2078 = vmatprep.subr.mxu0 0.0
    %2079 = vmatpush2.msra.mxu0 0.0
    %2080 = vmatprep.subr.mxu0 0.0
    %2081 = vmatpush2.msra.mxu0 0.0
    %2082 = vmatprep.subr.mxu0 0.0
    %2083 = vmatpush2.msra.mxu0 0.0
    %2084 = vmatprep.subr.mxu0 0.0
    %2085 = vmatpush2.msra.mxu0 0.0
    %2086 = vmatprep.subr.mxu0 0.0
    %2087 = vmatpush2.msra.mxu0 0.0
    %2088 = vmatprep.subr.mxu0 0.0
    %2089 = vmatpush2.msra.mxu0 0.0
    %2090 = vmatprep.subr.mxu0 0.0
    %2091 = vmatpush2.msra.mxu0 0.0
    %2092 = vmatprep.subr.mxu0 0.0
    %2093 = vmatpush2.msra.mxu0 0.0
    %2094 = vmatprep.subr.mxu0 0.0
    %2095 = vmatpush2.msra.mxu0 0.0
    %2096 = vmatprep.mubr.f32.mxu0 0.0
    %2097 = vmatmul.mubr.f32.gmra.mxu0 %v2030
    %v2098 = vpop.f32.mrf.mxu0
    %v2099 = vadd.f32 %v2024, %v2098
    %v2100 = vpop.f32.mrf.mxu0
    %2101 = vdwg.mxu0
    %v2102 = vadd.f32 %v2099, %v256
    %v2103 = vmul.f32 %v2102, %v263
    %v2104 = vtanh.pop %v2103
    %v2105 = vmul.f32 %v263, %v2104
    %v2106 = vadd.f32 %v2105, %v264
    %v2107 = vmul.f32 %v2106, %v1853
    %2109 = vrot.lane.b32.xlu0 %v2106, 64
    %v2110 = vpop.permute.xlu0 %2109
    %v2112 = vmul.f32 %v2106, %v2110
    %2114 = vrot.lane.b32.xlu0 %v2112, 32
    %v2115 = vpop.permute.xlu0 %2114
    %v2117 = vadd.f32 %v2107, %v2115
    %v2118 = vtanh.pop %v2117
    %2120 = vrot.lane.b32.xlu0 %v2118, 64
    %v2121 = vpop.permute.xlu0 %2120
    %v2123 = vmul.f32 %v2106, %v2121
    %2124 = vmatprep.subr.mxu0 0.0
    %2125 = vmatpush1.msra.mxu0 0.0
    %2126 = vmatprep.subr.mxu0 0.0
    %2127 = vmatpush1.msra.mxu0 0.0
    %2128 = vmatprep.subr.mxu0 0.0
    %2129 = vmatpush1.msra.mxu0 0.0
    %2130 = vmatprep.subr.mxu0 0.0
    %2131 = vmatpush1.msra.mxu0 0.0
    %2132 = vmatprep.subr.mxu0 0.0
    %2133 = vmatpush1.msra.mxu0 0.0
    %2134 = vmatprep.subr.mxu0 0.0
    %2135 = vmatpush1.msra.mxu0 0.0
    %2136 = vmatprep.subr.mxu0 0.0
    %2137 = vmatpush1.msra.mxu0 0.0
    %2138 = vmatprep.subr.mxu0 0.0
    %2139 = vmatpush1.msra.mxu0 0.0
    %2140 = vmatprep.subr.mxu0 0.0
    %2141 = vmatpush1.msra.mxu0 0.0
    %2142 = vmatprep.subr.mxu0 0.0
    %2143 = vmatpush1.msra.mxu0 0.0
    %2144 = vmatprep.subr.mxu0 0.0
    %2145 = vmatpush1.msra.mxu0 0.0
    %2146 = vmatprep.subr.mxu0 0.0
    %2147 = vmatpush1.msra.mxu0 0.0
    %2148 = vmatprep.subr.mxu0 0.0
    %2149 = vmatpush1.msra.mxu0 %v268
    %2150 = vmatprep.subr.mxu0 0.0
    %2151 = vmatpush1.msra.mxu0 %v267
    %2152 = vmatprep.subr.mxu0 0.0
    %2153 = vmatpush1.msra.mxu0 %v266
    %2154 = vmatprep.subr.mxu0 0.0
    %2155 = vmatpush1.msra.mxu0 %v265
    %2156 = vmatprep.subr.mxu0 0.0
    %2157 = vmatpush2.msra.mxu0 0.0
    %2158 = vmatprep.subr.mxu0 0.0
    %2159 = vmatpush2.msra.mxu0 0.0
    %2160 = vmatprep.subr.mxu0 0.0
    %2161 = vmatpush2.msra.mxu0 0.0
    %2162 = vmatprep.subr.mxu0 0.0
    %2163 = vmatpush2.msra.mxu0 0.0
    %2164 = vmatprep.subr.mxu0 0.0
    %2165 = vmatpush2.msra.mxu0 0.0
    %2166 = vmatprep.subr.mxu0 0.0
    %2167 = vmatpush2.msra.mxu0 0.0
    %2168 = vmatprep.subr.mxu0 0.0
    %2169 = vmatpush2.msra.mxu0 0.0
    %2170 = vmatprep.subr.mxu0 0.0
    %2171 = vmatpush2.msra.mxu0 0.0
    %2172 = vmatprep.subr.mxu0 0.0
    %2173 = vmatpush2.msra.mxu0 0.0
    %2174 = vmatprep.subr.mxu0 0.0
    %2175 = vmatpush2.msra.mxu0 0.0
    %2176 = vmatprep.subr.mxu0 0.0
    %2177 = vmatpush2.msra.mxu0 0.0
    %2178 = vmatprep.subr.mxu0 0.0
    %2179 = vmatpush2.msra.mxu0 0.0
    %2180 = vmatprep.subr.mxu0 0.0
    %2181 = vmatpush2.msra.mxu0 0.0
    %2182 = vmatprep.subr.mxu0 0.0
    %2183 = vmatpush2.msra.mxu0 0.0
    %2184 = vmatprep.subr.mxu0 0.0
    %2185 = vmatpush2.msra.mxu0 0.0
    %2186 = vmatprep.subr.mxu0 0.0
    %2187 = vmatpush2.msra.mxu0 0.0
    %2188 = vmatprep.mubr.f32.mxu0 0.0
    %2189 = vmatmul.mubr.f32.gmra.mxu0 %v2030
    %v2190 = vpop.f32.mrf.mxu0
    %v2191 = vadd.f32 0.0, %v2190
    %v2192 = vpop.f32.mrf.mxu0
    %2193 = vdwg.mxu0
    %v2194 = vadd.f32 %v248, %v2191
    %v2195 = vmul.f32 %v2194, %v263
    %v2196 = vtanh.pop %v2195
    %v2197 = vmul.f32 %v263, %v2196
    %v2198 = vadd.f32 %v2197, %v264
    %v2199 = vmul.f32 %v2198, %v1945
    %2201 = vrot.lane.b32.xlu0 %v2198, 64
    %v2202 = vpop.permute.xlu0 %2201
    %v2204 = vmul.f32 %v2198, %v2202
    %2206 = vrot.lane.b32.xlu0 %v2204, 32
    %v2207 = vpop.permute.xlu0 %2206
    %v2209 = vadd.f32 %v2199, %v2207
    %v2210 = vtanh.pop %v2209
    %2212 = vrot.lane.b32.xlu0 %v2210, 64
    %v2213 = vpop.permute.xlu0 %2212
    %v2215 = vmul.f32 %v2198, %v2213
    %2217 = vrot.lane.b32.xlu0 %v2123, 32
    %v2218 = vpop.permute.xlu0 %2217
    %v2219 = vsel %vm269, %v2218, 0
    %2221 = vmatprep.subr.mxu0 0.0
    %2222 = vmatpush1.msra.mxu0 0.0
    %2223 = vmatprep.subr.mxu0 0.0
    %2224 = vmatpush1.msra.mxu0 0.0
    %2225 = vmatprep.subr.mxu0 0.0
    %2226 = vmatpush1.msra.mxu0 0.0
    %2227 = vmatprep.subr.mxu0 0.0
    %2228 = vmatpush1.msra.mxu0 0.0
    %2229 = vmatprep.subr.mxu0 0.0
    %2230 = vmatpush1.msra.mxu0 0.0
    %2231 = vmatprep.subr.mxu0 0.0
    %2232 = vmatpush1.msra.mxu0 0.0
    %2233 = vmatprep.subr.mxu0 0.0
    %2234 = vmatpush1.msra.mxu0 0.0
    %2235 = vmatprep.subr.mxu0 0.0
    %2236 = vmatpush1.msra.mxu0 0.0
    %2237 = vmatprep.subr.mxu0 0.0
    %2238 = vmatpush1.msra.mxu0 0.0
    %2239 = vmatprep.subr.mxu0 0.0
    %2240 = vmatpush1.msra.mxu0 0.0
    %2241 = vmatprep.subr.mxu0 0.0
    %2242 = vmatpush1.msra.mxu0 0.0
    %2243 = vmatprep.subr.mxu0 0.0
    %2244 = vmatpush1.msra.mxu0 0.0
    %2245 = vmatprep.subr.mxu0 0.0
    %2246 = vmatpush1.msra.mxu0 %v372
    %2247 = vmatprep.subr.mxu0 0.0
    %2248 = vmatpush1.msra.mxu0 %v371
    %2249 = vmatprep.subr.mxu0 0.0
    %2250 = vmatpush1.msra.mxu0 %v370
    %2251 = vmatprep.subr.mxu0 0.0
    %2252 = vmatpush1.msra.mxu0 %v369
    %2253 = vmatprep.subr.mxu0 0.0
    %2254 = vmatpush2.msra.mxu0 0.0
    %2255 = vmatprep.subr.mxu0 0.0
    %2256 = vmatpush2.msra.mxu0 0.0
    %2257 = vmatprep.subr.mxu0 0.0
    %2258 = vmatpush2.msra.mxu0 0.0
    %2259 = vmatprep.subr.mxu0 0.0
    %2260 = vmatpush2.msra.mxu0 0.0
    %2261 = vmatprep.subr.mxu0 0.0
    %2262 = vmatpush2.msra.mxu0 0.0
    %2263 = vmatprep.subr.mxu0 0.0
    %2264 = vmatpush2.msra.mxu0 0.0
    %2265 = vmatprep.subr.mxu0 0.0
    %2266 = vmatpush2.msra.mxu0 0.0
    %2267 = vmatprep.subr.mxu0 0.0
    %2268 = vmatpush2.msra.mxu0 0.0
    %2269 = vmatprep.subr.mxu0 0.0
    %2270 = vmatpush2.msra.mxu0 0.0
    %2271 = vmatprep.subr.mxu0 0.0
    %2272 = vmatpush2.msra.mxu0 0.0
    %2273 = vmatprep.subr.mxu0 0.0
    %2274 = vmatpush2.msra.mxu0 0.0
    %2275 = vmatprep.subr.mxu0 0.0
    %2276 = vmatpush2.msra.mxu0 0.0
    %2277 = vmatprep.subr.mxu0 0.0
    %2278 = vmatpush2.msra.mxu0 0.0
    %2279 = vmatprep.subr.mxu0 0.0
    %2280 = vmatpush2.msra.mxu0 0.0
    %2281 = vmatprep.subr.mxu0 0.0
    %2282 = vmatpush2.msra.mxu0 0.0
    %2283 = vmatprep.subr.mxu0 0.0
    %2284 = vmatpush2.msra.mxu0 0.0
    %2285 = vmatprep.mubr.f32.mxu0 0.0
    %2286 = vmatmul.mubr.f32.gmra.mxu0 %v2219
    %v2287 = vpop.f32.mrf.mxu0
    %v2288 = vadd.f32 0.0, %v2287
    %v2289 = vpop.f32.mrf.mxu0
    %2290 = vdwg.mxu0
    %2292 = vrot.lane.b32.xlu0 %v2215, 32
    %v2293 = vpop.permute.xlu0 %2292
    %v2294 = vsel %vm269, %v2293, 0
    %2296 = vmatprep.subr.mxu0 0.0
    %2297 = vmatpush1.msra.mxu0 0.0
    %2298 = vmatprep.subr.mxu0 0.0
    %2299 = vmatpush1.msra.mxu0 0.0
    %2300 = vmatprep.subr.mxu0 0.0
    %2301 = vmatpush1.msra.mxu0 0.0
    %2302 = vmatprep.subr.mxu0 0.0
    %2303 = vmatpush1.msra.mxu0 0.0
    %2304 = vmatprep.subr.mxu0 0.0
    %2305 = vmatpush1.msra.mxu0 0.0
    %2306 = vmatprep.subr.mxu0 0.0
    %2307 = vmatpush1.msra.mxu0 0.0
    %2308 = vmatprep.subr.mxu0 0.0
    %2309 = vmatpush1.msra.mxu0 0.0
    %2310 = vmatprep.subr.mxu0 0.0
    %2311 = vmatpush1.msra.mxu0 0.0
    %2312 = vmatprep.subr.mxu0 0.0
    %2313 = vmatpush1.msra.mxu0 0.0
    %2314 = vmatprep.subr.mxu0 0.0
    %2315 = vmatpush1.msra.mxu0 0.0
    %2316 = vmatprep.subr.mxu0 0.0
    %2317 = vmatpush1.msra.mxu0 0.0
    %2318 = vmatprep.subr.mxu0 0.0
    %2319 = vmatpush1.msra.mxu0 0.0
    %2320 = vmatprep.subr.mxu0 0.0
    %2321 = vmatpush1.msra.mxu0 %v368
    %2322 = vmatprep.subr.mxu0 0.0
    %2323 = vmatpush1.msra.mxu0 %v367
    %2324 = vmatprep.subr.mxu0 0.0
    %2325 = vmatpush1.msra.mxu0 %v366
    %2326 = vmatprep.subr.mxu0 0.0
    %2327 = vmatpush1.msra.mxu0 %v365
    %2328 = vmatprep.subr.mxu0 0.0
    %2329 = vmatpush2.msra.mxu0 0.0
    %2330 = vmatprep.subr.mxu0 0.0
    %2331 = vmatpush2.msra.mxu0 0.0
    %2332 = vmatprep.subr.mxu0 0.0
    %2333 = vmatpush2.msra.mxu0 0.0
    %2334 = vmatprep.subr.mxu0 0.0
    %2335 = vmatpush2.msra.mxu0 0.0
    %2336 = vmatprep.subr.mxu0 0.0
    %2337 = vmatpush2.msra.mxu0 0.0
    %2338 = vmatprep.subr.mxu0 0.0
    %2339 = vmatpush2.msra.mxu0 0.0
    %2340 = vmatprep.subr.mxu0 0.0
    %2341 = vmatpush2.msra.mxu0 0.0
    %2342 = vmatprep.subr.mxu0 0.0
    %2343 = vmatpush2.msra.mxu0 0.0
    %2344 = vmatprep.subr.mxu0 0.0
    %2345 = vmatpush2.msra.mxu0 0.0
    %2346 = vmatprep.subr.mxu0 0.0
    %2347 = vmatpush2.msra.mxu0 0.0
    %2348 = vmatprep.subr.mxu0 0.0
    %2349 = vmatpush2.msra.mxu0 0.0
    %2350 = vmatprep.subr.mxu0 0.0
    %2351 = vmatpush2.msra.mxu0 0.0
    %2352 = vmatprep.subr.mxu0 0.0
    %2353 = vmatpush2.msra.mxu0 0.0
    %2354 = vmatprep.subr.mxu0 0.0
    %2355 = vmatpush2.msra.mxu0 0.0
    %2356 = vmatprep.subr.mxu0 0.0
    %2357 = vmatpush2.msra.mxu0 0.0
    %2358 = vmatprep.subr.mxu0 0.0
    %2359 = vmatpush2.msra.mxu0 0.0
    %2360 = vmatprep.mubr.f32.mxu0 0.0
    %2361 = vmatmul.mubr.f32.gmra.mxu0 %v2294
    %v2362 = vpop.f32.mrf.mxu0
    %v2363 = vadd.f32 %v2288, %v2362
    %v2364 = vpop.f32.mrf.mxu0
    %2365 = vdwg.mxu0
    %v2366 = vadd.f32 %v2363, %v256
    %v2367 = vmul.f32 %v2366, %v263
    %v2368 = vtanh.pop %v2367
    %v2369 = vmul.f32 %v263, %v2368
    %v2370 = vadd.f32 %v2369, %v264
    %v2371 = vmul.f32 %v2370, %v2117
    %2373 = vrot.lane.b32.xlu0 %v2370, 64
    %v2374 = vpop.permute.xlu0 %2373
    %v2376 = vmul.f32 %v2370, %v2374
    %2378 = vrot.lane.b32.xlu0 %v2376, 32
    %v2379 = vpop.permute.xlu0 %2378
    %v2381 = vadd.f32 %v2371, %v2379
    %v2382 = vtanh.pop %v2381
    %2384 = vrot.lane.b32.xlu0 %v2382, 64
    %v2385 = vpop.permute.xlu0 %2384
    %v2387 = vmul.f32 %v2370, %v2385
    %v2388 = vld [vmem:[#allocation11] sm:$0xff]
    %v2389 = vld [vmem:[#allocation11 + $0x8] sm:$0xff]
    %v2390 = vld [vmem:[#allocation11 + $0x10] sm:$0xff]
    %v2391 = vld [vmem:[#allocation11 + $0x18] sm:$0xff]
    %v2392 = vld [vmem:[%s8] sm:$0x1]
    %v2394 = vlaneseq
    %v2395 = vshrl.u32 %v2394, 7
    %v2396 = vsub.s32 0, %v2395
    %v2397 = vrot.slane %v2392, %v2396
    %2400 = vrot.lane.b32.xlu0 %v2387, 32
    %v2401 = vpop.permute.xlu0 %2400
    %v2402 = vsel %vm269, %v2401, 0
    %2404 = vmatprep.subr.mxu0 0.0
    %2405 = vmatpush1.msra.mxu0 0.0
    %2406 = vmatprep.subr.mxu0 0.0
    %2407 = vmatpush1.msra.mxu0 0.0
    %2408 = vmatprep.subr.mxu0 0.0
    %2409 = vmatpush1.msra.mxu0 0.0
    %2410 = vmatprep.subr.mxu0 0.0
    %2411 = vmatpush1.msra.mxu0 0.0
    %2412 = vmatprep.subr.mxu0 0.0
    %2413 = vmatpush1.msra.mxu0 0.0
    %2414 = vmatprep.subr.mxu0 0.0
    %2415 = vmatpush1.msra.mxu0 0.0
    %2416 = vmatprep.subr.mxu0 0.0
    %2417 = vmatpush1.msra.mxu0 0.0
    %2418 = vmatprep.subr.mxu0 0.0
    %2419 = vmatpush1.msra.mxu0 0.0
    %2420 = vmatprep.subr.mxu0 0.0
    %2421 = vmatpush1.msra.mxu0 0.0
    %2422 = vmatprep.subr.mxu0 0.0
    %2423 = vmatpush1.msra.mxu0 0.0
    %2424 = vmatprep.subr.mxu0 0.0
    %2425 = vmatpush1.msra.mxu0 0.0
    %2426 = vmatprep.subr.mxu0 0.0
    %2427 = vmatpush1.msra.mxu0 0.0
    %2428 = vmatprep.subr.mxu0 0.0
    %2429 = vmatpush1.msra.mxu0 %v2391
    %2430 = vmatprep.subr.mxu0 0.0
    %2431 = vmatpush1.msra.mxu0 %v2390
    %2432 = vmatprep.subr.mxu0 0.0
    %2433 = vmatpush1.msra.mxu0 %v2389
    %2434 = vmatprep.subr.mxu0 0.0
    %2435 = vmatpush1.msra.mxu0 %v2388
    %2436 = vmatprep.subr.mxu0 0.0
    %2437 = vmatpush2.msra.mxu0 0.0
    %2438 = vmatprep.subr.mxu0 0.0
    %2439 = vmatpush2.msra.mxu0 0.0
    %2440 = vmatprep.subr.mxu0 0.0
    %2441 = vmatpush2.msra.mxu0 0.0
    %2442 = vmatprep.subr.mxu0 0.0
    %2443 = vmatpush2.msra.mxu0 0.0
    %2444 = vmatprep.subr.mxu0 0.0
    %2445 = vmatpush2.msra.mxu0 0.0
    %2446 = vmatprep.subr.mxu0 0.0
    %2447 = vmatpush2.msra.mxu0 0.0
    %2448 = vmatprep.subr.mxu0 0.0
    %2449 = vmatpush2.msra.mxu0 0.0
    %2450 = vmatprep.subr.mxu0 0.0
    %2451 = vmatpush2.msra.mxu0 0.0
    %2452 = vmatprep.subr.mxu0 0.0
    %2453 = vmatpush2.msra.mxu0 0.0
    %2454 = vmatprep.subr.mxu0 0.0
    %2455 = vmatpush2.msra.mxu0 0.0
    %2456 = vmatprep.subr.mxu0 0.0
    %2457 = vmatpush2.msra.mxu0 0.0
    %2458 = vmatprep.subr.mxu0 0.0
    %2459 = vmatpush2.msra.mxu0 0.0
    %2460 = vmatprep.subr.mxu0 0.0
    %2461 = vmatpush2.msra.mxu0 0.0
    %2462 = vmatprep.subr.mxu0 0.0
    %2463 = vmatpush2.msra.mxu0 0.0
    %2464 = vmatprep.subr.mxu0 0.0
    %2465 = vmatpush2.msra.mxu0 0.0
    %2466 = vmatprep.subr.mxu0 0.0
    %2467 = vmatpush2.msra.mxu0 0.0
    %2468 = vmatprep.mubr.f32.mxu0 0.0
    %2469 = vmatmul.mubr.f32.gmra.mxu0 %v635
    %v2470 = vpop.f32.mrf.mxu0
    %v2471 = vadd.f32 %v2397, %v2470
    %v2472 = vpop.f32.mrf.mxu0
    %2473 = vmatprep.mubr.f32.mxu0 0.0
    %2474 = vmatmul.mubr.f32.gmra.mxu0 %v899
    %v2475 = vpop.f32.mrf.mxu0
    %v2476 = vadd.f32 %v2397, %v2475
    %v2477 = vpop.f32.mrf.mxu0
    %2478 = vmatprep.mubr.f32.mxu0 0.0
    %2479 = vmatmul.mubr.f32.gmra.mxu0 %v1163
    %v2480 = vpop.f32.mrf.mxu0
    %v2481 = vadd.f32 %v2397, %v2480
    %v2482 = vpop.f32.mrf.mxu0
    %2483 = vmatprep.mubr.f32.mxu0 0.0
    %2484 = vmatmul.mubr.f32.gmra.mxu0 %v1427
    %v2485 = vpop.f32.mrf.mxu0
    %v2486 = vadd.f32 %v2397, %v2485
    %v2487 = vpop.f32.mrf.mxu0
    %2488 = vmatprep.mubr.f32.mxu0 0.0
    %2489 = vmatmul.mubr.f32.gmra.mxu0 %v1691
    %v2490 = vpop.f32.mrf.mxu0
    %v2491 = vadd.f32 %v2397, %v2490
    %v2492 = vpop.f32.mrf.mxu0
    %2493 = vmatprep.mubr.f32.mxu0 0.0
    %2494 = vmatmul.mubr.f32.gmra.mxu0 %v1955
    %v2495 = vpop.f32.mrf.mxu0
    %v2496 = vadd.f32 %v2397, %v2495
    %v2497 = vpop.f32.mrf.mxu0
    %2498 = vmatprep.mubr.f32.mxu0 0.0
    %2499 = vmatmul.mubr.f32.gmra.mxu0 %v2219
    %v2500 = vpop.f32.mrf.mxu0
    %v2501 = vadd.f32 %v2397, %v2500
    %v2502 = vpop.f32.mrf.mxu0
    %2503 = vmatprep.mubr.f32.mxu0 0.0
    %2504 = vmatmul.mubr.f32.gmra.mxu0 %v2402
    %v2505 = vpop.f32.mrf.mxu0
    %v2506 = vadd.f32 %v2397, %v2505
    %v2507 = vpop.f32.mrf.mxu0
    %2508 = vdwg.mxu0
    %2509 = vst [vmem:[#allocation13] sm:$0xff] %v2471
    %2510 = vst [vmem:[#allocation13 + $0x8] sm:$0xff] %v2476
    %2511 = vst [vmem:[#allocation13 + $0x10] sm:$0xff] %v2481
    %2512 = vst [vmem:[#allocation13 + $0x18] sm:$0xff] %v2486
    %2513 = vst [vmem:[#allocation13 + $0x20] sm:$0xff] %v2491
    %2514 = vst [vmem:[#allocation13 + $0x28] sm:$0xff] %v2496
    %2515 = vst [vmem:[#allocation13 + $0x30] sm:$0xff] %v2501
    %2516 = vst [vmem:[#allocation13 + $0x38] sm:$0xff] %v2506
    // Predicated region
    $region62: #{text_generation_forward.1} parent=1 // pred_check
      _
    $region63: #{text_generation_forward.1} parent=1 // pred_check_branch
      %2518 = sbr.rel (0) target = $region65
    $region64: #{text_generation_forward.1} parent=1 // pred_region
      %s2520 = ssub.s32 1024, 1024
      %2521 = vsyncadd [#allocation4], %s2520
      %s2522 = sshll.u32 [#allocation13], 4
      %s2523 = int_to_ptr.vmem [resolvable:$true] %s2522
      %2528 = dma.vmem_to_hbm [thread:$0]  %s2523, 1024, %s9, [#allocation4], 128, 128, 8
    $region65: #{text_generation_forward.1} parent=1 // pred_fallthru
      _
    // Predicated region
    $region66: #{text_generation_forward.1} parent=1 // pred_check
      _
    $region67: #{text_generation_forward.1} parent=1 // pred_check_branch
      %2530 = sbr.rel (0) target = $region69
    $region68: #{text_generation_forward.1} parent=1 // pred_region
      %2531 = dma.done [#allocation4], 1024
    $region69: #{text_generation_forward.1} parent=1 // pred_fallthru
      _
    %2532 = vsyncpa [#allocation3], 1
    %2533 = vsyncpa [#allocation6], 1
    %2534 = vsyncpa [#allocation9], 1
    %2535 = vsyncpa [#allocation12], 1
    %2536 = vsyncpa [#allocation4], 1

</llo_original>
